<compile_context>
chip_gen: v7x
topology: tpu7x:2x2x1
jax: 0.10.0
libtpu: 0.0.40
codegen_flags: <defaults>
</compile_context>

<pallas_src>
import jax
import jax.numpy as jnp
from jax import lax
from jax.experimental import pallas as pl
from jax.experimental.pallas import tpu as pltpu

EPS = 1e-5                         # PyTorch BatchNorm2d default eps
VMEM_LIMIT = 48 * 1024 * 1024      # raise scoped VMEM above the 16/32 MiB defaults
                                   # (still < 64 MiB physical per-TC on v7x)


def _round_up(x, m):
    return ((x + m - 1) // m) * m


# ---------------------------------------------------------------------------
# Kernel A: one row tile of the im2col'd conv + partial BN statistics.
# ---------------------------------------------------------------------------
def _conv_stats_kernel(p_ref, w_ref, y_ref, stats_ref):
    """p_ref:(TM,K) bf16, w_ref:(K,C) bf16 ->
       y_ref:(TM,C) f32 raw conv output,
       stats_ref:(1,2,C) f32 = [per-channel sum, per-channel sum of squares]."""
    acc = jnp.dot(p_ref[...], w_ref[...],
                  preferred_element_type=jnp.float32)       # MXU, f32 accumulate
    y_ref[...] = acc
    s = jnp.sum(acc, axis=0, keepdims=True)                 # (1, C)
    ss = jnp.sum(acc * acc, axis=0, keepdims=True)          # (1, C)
    stats_ref[...] = jnp.concatenate([s, ss], axis=0)[None, :, :]


# ---------------------------------------------------------------------------
# Kernel B: fused BatchNorm affine (precomputed scale/shift) + ReLU.
# ---------------------------------------------------------------------------
def _bn_relu_kernel(y_ref, scale_ref, shift_ref, o_ref):
    y = y_ref[...] * scale_ref[...] + shift_ref[...]
    o_ref[...] = jnp.maximum(y, 0.0).astype(o_ref.dtype)


# ---------------------------------------------------------------------------
# Wrapper glue
# ---------------------------------------------------------------------------
def _im2col_3x3(x_nhwc):
    """(N,H,W,C) -> (N*H*W, 9*C) patches; tap order (dy, dx, c) matches
    w_hwio.reshape(9*C, Cout).  Done in XLA so the kernel is one fat-K matmul."""
    N, H, W, C = x_nhwc.shape
    xp = jnp.pad(x_nhwc, ((0, 0), (1, 1), (1, 1), (0, 0)))
    cols = [xp[:, dy:dy + H, dx:dx + W, :] for dy in range(3) for dx in range(3)]
    patches = jnp.concatenate(cols, axis=-1)                # (N, H, W, 9*C)
    return patches.reshape(N * H * W, 9 * C)


def _conv_rows_and_stats(patches_bf16, wmat_bf16, row_tile):
    m_pad, K = patches_bf16.shape
    Cout = wmat_bf16.shape[1]
    n_tiles = m_pad // row_tile
    return pl.pallas_call(
        _conv_stats_kernel,
        out_shape=(
            jax.ShapeDtypeStruct((m_pad, Cout), jnp.float32),
            jax.ShapeDtypeStruct((n_tiles, 2, Cout), jnp.float32),
        ),
        grid_spec=pltpu.PrefetchScalarGridSpec(
            num_scalar_prefetch=0,
            grid=(n_tiles,),
            in_specs=[
                pl.BlockSpec((row_tile, K), lambda i: (i, 0)),
                pl.BlockSpec((K, Cout), lambda i: (0, 0)),       # weights resident
            ],
            out_specs=(
                pl.BlockSpec((row_tile, Cout), lambda i: (i, 0)),
                pl.BlockSpec((1, 2, Cout), lambda i: (i, 0, 0)),  # per-tile partials
            ),
        ),
        compiler_params=pltpu.CompilerParams(
            dimension_semantics=("parallel",),                   # megacore on v7x
            vmem_limit_bytes=VMEM_LIMIT,
        ),
    )(patches_bf16, wmat_bf16)


def _bn_relu_apply(y_raw, scale, shift, out_dtype, *, row_tile=512):
    """Tiled affine+ReLU.  Re-view (M, C) as a lane-dense (M*C/128, 128) slab
    when possible (free contiguous reshape) so stores are unmasked 128-wide."""
    m_pad, C = y_raw.shape
    if 128 % C == 0 and (m_pad * C) % 128 == 0:
        L = 128
        rep = L // C
        y2 = y_raw.reshape((m_pad * C) // L, L)
        scale2 = jnp.tile(scale, (1, rep))
        shift2 = jnp.tile(shift, (1, rep))
    else:
        L = C                                    # C >= 128-friendly path falls here
        y2, scale2, shift2 = y_raw, scale, shift
    R = y2.shape[0]
    tr = min(row_tile, _round_up(R, 8))
    r_pad = _round_up(R, tr)
    if r_pad != R:
        y2 = jnp.pad(y2, ((0, r_pad - R), (0, 0)))
    out2 = pl.pallas_call(
        _bn_relu_kernel,
        out_shape=jax.ShapeDtypeStruct((r_pad, L), out_dtype),
        grid_spec=pltpu.PrefetchScalarGridSpec(
            num_scalar_prefetch=0,
            grid=(r_pad // tr,),
            in_specs=[
                pl.BlockSpec((tr, L), lambda i: (i, 0)),
                pl.BlockSpec((1, L), lambda i: (0, 0)),
                pl.BlockSpec((1, L), lambda i: (0, 0)),
            ],
            out_specs=pl.BlockSpec((tr, L), lambda i: (i, 0)),
        ),
        compiler_params=pltpu.CompilerParams(
            dimension_semantics=("parallel",),
            vmem_limit_bytes=VMEM_LIMIT,
        ),
    )(y2, scale2, shift2)
    return out2[:R].reshape(m_pad, C)


def _conv_bn_relu_stage(x_nhwc, w_hwio, gamma, beta, *,
                        out_dtype=jnp.float32, row_tile=256):
    """One Conv3x3 + BatchNorm2d(batch stats) + ReLU stage, NHWC in/out.
    row_tile=256 keeps the toy test multi-tile; use 512-1024 at real UNet shapes."""
    N, H, W, Cin = x_nhwc.shape
    Cout = w_hwio.shape[-1]
    K = 9 * Cin
    M = N * H * W

    patches = _im2col_3x3(x_nhwc).astype(jnp.bfloat16)       # bf16 MXU operands
    wmat = w_hwio.reshape(K, Cout).astype(jnp.bfloat16)

    tm = min(row_tile, _round_up(M, 8))
    m_pad = _round_up(M, tm)
    if m_pad != M:
        # zero rows -> conv output 0 -> contribute 0 to sum/sumsq (mean uses real M)
        patches = jnp.pad(patches, ((0, m_pad - M), (0, 0)))

    y_raw, part_stats = _conv_rows_and_stats(patches, wmat, tm)

    # Finish the two-pass BN reduction on the tiny (n_tiles, 2, Cout) partials.
    # f32 accumulators; clamp guards E[x^2]-E[x]^2 cancellation (see review).
    total = jnp.sum(part_stats, axis=0)                      # (2, Cout) f32
    mean = total[0] / M
    var = jnp.maximum(total[1] / M - mean * mean, 0.0)       # biased variance
    inv_std = lax.rsqrt(var + EPS)
    g = gamma.astype(jnp.float32)
    b = beta.astype(jnp.float32)
    scale = (g * inv_std).reshape(1, Cout)
    shift = (b - mean * g * inv_std).reshape(1, Cout)

    h = _bn_relu_apply(y_raw, scale, shift, out_dtype)
    return h[:M].reshape(N, H, W, Cout)


def double_conv(x_nchw, params):
    """DoubleConv forward: (N, Cin, H, W) -> (N, Cout, H, W)."""
    w1, g1, b1, w2, g2, b2 = params
    x = jnp.transpose(x_nchw, (0, 2, 3, 1))                  # NCHW -> NHWC (once)
    h = _conv_bn_relu_stage(x, w1, g1, b1, out_dtype=jnp.bfloat16)
    y = _conv_bn_relu_stage(h, w2, g2, b2, out_dtype=jnp.float32)
    return jnp.transpose(y, (0, 3, 1, 2))                    # NHWC -> NCHW (once)


def init_params(key, in_channels, out_channels):
    """Shapes match nn.Conv2d(3x3, bias=False) + nn.BatchNorm2d; HWIO weights."""
    k1, k2 = jax.random.split(key)
    scale1 = (2.0 / (in_channels * 9)) ** 0.5
    scale2 = (2.0 / (out_channels * 9)) ** 0.5
    w1 = scale1 * jax.random.normal(k1, (3, 3, in_channels, out_channels), jnp.float32)
    w2 = scale2 * jax.random.normal(k2, (3, 3, out_channels, out_channels), jnp.float32)
    g1 = jnp.ones((out_channels,), jnp.float32)
    b1 = jnp.zeros((out_channels,), jnp.float32)
    g2 = jnp.ones((out_channels,), jnp.float32)
    b2 = jnp.zeros((out_channels,), jnp.float32)
    return (w1, g1, b1, w2, g2, b2)


def _reference_double_conv(x_nchw, params):
    """Pure-JAX f32 reference (training-mode BN with batch stats)."""
    w1, g1, b1, w2, g2, b2 = params

    def stage(x, w, g, b):
        y = lax.conv_general_dilated(
            x, w, window_strides=(1, 1), padding=((1, 1), (1, 1)),
            dimension_numbers=("NHWC", "HWIO", "NHWC"),
            precision=lax.Precision.HIGHEST)
        mean = jnp.mean(y, axis=(0, 1, 2))
        var = jnp.mean((y - mean) ** 2, axis=(0, 1, 2))
        yn = (y - mean) * lax.rsqrt(var + EPS) * g + b
        return jnp.maximum(yn, 0.0)

    x = jnp.transpose(x_nchw, (0, 2, 3, 1))
    h = stage(x, w1, g1, b1)
    y = stage(h, w2, g2, b2)
    return jnp.transpose(y, (0, 3, 1, 2))


if __name__ == "__main__":
    key = jax.random.PRNGKey(0)
    kx, kp = jax.random.split(key)

    N, Cin, H, W = 2, 4, 16, 16
    Cout = 8

    x = jax.random.normal(kx, (N, Cin, H, W), jnp.float32)
    params = init_params(kp, Cin, Cout)

    y = jax.jit(double_conv)(x, params)
    y = jax.block_until_ready(y)

    assert y.shape == (N, Cout, H, W), y.shape
    assert bool(jnp.all(jnp.isfinite(y)))
    assert bool(jnp.all(y >= 0.0))          # final ReLU

    # Loose tolerance: matmul operands are bf16 (f32 accumulation + f32 BN).
    y_ref = _reference_double_conv(x, params)
    max_err = float(jnp.max(jnp.abs(y - y_ref)))
    assert max_err < 1e-1, f"max abs err vs reference: {max_err}"

    print("KERNEL_OK")
</pallas_src>

<mosaic_0001>
module attributes {stable_mosaic.version = 11 : i64} {
  func.func @_conv_stats_kernel(%arg0: i32, %arg1: memref<256x36xbf16, #tpu.memory_space<vmem>>, %arg2: memref<36x8xbf16, #tpu.memory_space<vmem>>, %arg3: memref<256x8xf32, #tpu.memory_space<vmem>>, %arg4: memref<1x2x8xf32, #tpu.memory_space<vmem>>) attributes {dimension_semantics = [#tpu.dimension_semantics<parallel>], iteration_bounds = array<i64: 2>, scalar_prefetch = 0 : i64, scratch_operands = 0 : i64, tpu.core_type = #tpu.core_type<tc>, window_params = [{transform_indices = @transform_0, window_bounds = array<i64: 256, 36>}, {pipeline_mode = #tpu.pipeline_mode<synchronous>, transform_indices = @transform_1, window_bounds = array<i64: 36, 8>}, {transform_indices = @transform_2, window_bounds = array<i64: 256, 8>}, {transform_indices = @transform_3, window_bounds = array<i64: 1, 2, 8>}]} {
    %c0 = arith.constant 0 : index
    %c0_0 = arith.constant 0 : index
    %0 = vector.load %arg1[%c0, %c0_0] : memref<256x36xbf16, #tpu.memory_space<vmem>>, vector<256x36xbf16>
    %c0_1 = arith.constant 0 : index
    %c0_2 = arith.constant 0 : index
    %1 = vector.load %arg2[%c0_1, %c0_2] : memref<36x8xbf16, #tpu.memory_space<vmem>>, vector<36x8xbf16>
    %cst = arith.constant dense<0.000000e+00> : vector<256x8xf32>
    %2 = tpu.matmul %0, %1, %cst {dimension_numbers = #tpu.dot_dimension_numbers<[1], [0], [0], [1], [0, 0, 1, 1], [], []>} : vector<256x36xbf16>, vector<36x8xbf16>, vector<256x8xf32> -> vector<256x8xf32>
    %c0_3 = arith.constant 0 : index
    %c0_4 = arith.constant 0 : index
    %3 = vector.load %arg3[%c0_3, %c0_4] : memref<256x8xf32, #tpu.memory_space<vmem>>, vector<256x8xf32>
    tpu.vector_store %arg3[%c0_3, %c0_4], %2 {strides = array<i32>} : memref<256x8xf32, #tpu.memory_space<vmem>>, vector<256x8xf32>,
    %cst_5 = arith.constant dense<0.000000e+00> : vector<8xf32>
    %4 = vector.multi_reduction <add>, %2, %cst_5 [0] : vector<256x8xf32> to vector<8xf32>
    %5 = vector.shape_cast %4 : vector<8xf32> to vector<1x8xf32>
    %6 = arith.mulf %2, %2 : vector<256x8xf32>
    %cst_6 = arith.constant dense<0.000000e+00> : vector<8xf32>
    %7 = vector.multi_reduction <add>, %6, %cst_6 [0] : vector<256x8xf32> to vector<8xf32>
    %8 = vector.shape_cast %7 : vector<8xf32> to vector<1x8xf32>
    %9 = tpu.concatenate %5, %8 in 0 : vector<1x8xf32>, vector<1x8xf32> -> vector<2x8xf32>
    %10 = vector.shape_cast %9 : vector<2x8xf32> to vector<1x2x8xf32>
    %c0_7 = arith.constant 0 : index
    %c0_8 = arith.constant 0 : index
    %c0_9 = arith.constant 0 : index
    %11 = vector.load %arg4[%c0_7, %c0_8, %c0_9] : memref<1x2x8xf32, #tpu.memory_space<vmem>>, vector<1x2x8xf32>
    tpu.vector_store %arg4[%c0_7, %c0_8, %c0_9], %10 {strides = array<i32>} : memref<1x2x8xf32, #tpu.memory_space<vmem>>, vector<1x2x8xf32>,
    return
  }
  func.func @transform_0(%arg0: i32) -> (i32, i32) {
    %c0_i32 = arith.constant 0 : i32
    %c0_i32_0 = arith.constant 0 : i32
    return %arg0, %c0_i32 : i32, i32
  }
  func.func @transform_1(%arg0: i32) -> (i32, i32) {
    %c0_i32 = arith.constant 0 : i32
    %c0_i32_0 = arith.constant 0 : i32
    %c0_i32_1 = arith.constant 0 : i32
    return %c0_i32, %c0_i32_0 : i32, i32
  }
  func.func @transform_2(%arg0: i32) -> (i32, i32) {
    %c0_i32 = arith.constant 0 : i32
    %c0_i32_0 = arith.constant 0 : i32
    return %arg0, %c0_i32 : i32, i32
  }
  func.func @transform_3(%arg0: i32) -> (i32, i32, i32) {
    %c0_i32 = arith.constant 0 : i32
    %c0_i32_0 = arith.constant 0 : i32
    %c0_i32_1 = arith.constant 0 : i32
    return %arg0, %c0_i32, %c0_i32_0 : i32, i32, i32
  }
}

module attributes {stable_mosaic.version = 11 : i64} {
  func.func @_bn_relu_kernel(%arg0: i32, %arg1: memref<32x128xf32, #tpu.memory_space<vmem>>, %arg2: memref<1x128xf32, #tpu.memory_space<vmem>>, %arg3: memref<1x128xf32, #tpu.memory_space<vmem>>, %arg4: memref<32x128xbf16, #tpu.memory_space<vmem>>) attributes {dimension_semantics = [#tpu.dimension_semantics<parallel>], iteration_bounds = array<i64: 1>, scalar_prefetch = 0 : i64, scratch_operands = 0 : i64, tpu.core_type = #tpu.core_type<tc>, window_params = [{transform_indices = @transform_0, window_bounds = array<i64: 32, 128>}, {pipeline_mode = #tpu.pipeline_mode<synchronous>, transform_indices = @transform_1, window_bounds = array<i64: 1, 128>}, {pipeline_mode = #tpu.pipeline_mode<synchronous>, transform_indices = @transform_2, window_bounds = array<i64: 1, 128>}, {transform_indices = @transform_3, window_bounds = array<i64: 32, 128>}]} {
    %c0 = arith.constant 0 : index
    %c0_0 = arith.constant 0 : index
    %0 = vector.load %arg1[%c0, %c0_0] : memref<32x128xf32, #tpu.memory_space<vmem>>, vector<32x128xf32>
    %c0_1 = arith.constant 0 : index
    %c0_2 = arith.constant 0 : index
    %1 = vector.load %arg2[%c0_1, %c0_2] : memref<1x128xf32, #tpu.memory_space<vmem>>, vector<1x128xf32>
    %2 = vector.broadcast %1 : vector<1x128xf32> to vector<32x128xf32>
    %3 = arith.mulf %0, %2 : vector<32x128xf32>
    %c0_3 = arith.constant 0 : index
    %c0_4 = arith.constant 0 : index
    %4 = vector.load %arg3[%c0_3, %c0_4] : memref<1x128xf32, #tpu.memory_space<vmem>>, vector<1x128xf32>
    %5 = vector.broadcast %4 : vector<1x128xf32> to vector<32x128xf32>
    %6 = arith.addf %3, %5 : vector<32x128xf32>
    %cst = arith.constant 0.000000e+00 : f32
    %7 = vector.broadcast %cst : f32 to vector<32x128xf32>
    %8 = arith.maximumf %6, %7 : vector<32x128xf32>
    %9 = arith.truncf %8 : vector<32x128xf32> to vector<32x128xbf16>
    %c0_5 = arith.constant 0 : index
    %c0_6 = arith.constant 0 : index
    %10 = vector.load %arg4[%c0_5, %c0_6] : memref<32x128xbf16, #tpu.memory_space<vmem>>, vector<32x128xbf16>
    tpu.vector_store %arg4[%c0_5, %c0_6], %9 {strides = array<i32>} : memref<32x128xbf16, #tpu.memory_space<vmem>>, vector<32x128xbf16>,
    return
  }
  func.func @transform_0(%arg0: i32) -> (i32, i32) {
    %c0_i32 = arith.constant 0 : i32
    %c0_i32_0 = arith.constant 0 : i32
    return %arg0, %c0_i32 : i32, i32
  }
  func.func @transform_1(%arg0: i32) -> (i32, i32) {
    %c0_i32 = arith.constant 0 : i32
    %c0_i32_0 = arith.constant 0 : i32
    %c0_i32_1 = arith.constant 0 : i32
    return %c0_i32, %c0_i32_0 : i32, i32
  }
  func.func @transform_2(%arg0: i32) -> (i32, i32) {
    %c0_i32 = arith.constant 0 : i32
    %c0_i32_0 = arith.constant 0 : i32
    %c0_i32_1 = arith.constant 0 : i32
    return %c0_i32, %c0_i32_0 : i32, i32
  }
  func.func @transform_3(%arg0: i32) -> (i32, i32) {
    %c0_i32 = arith.constant 0 : i32
    %c0_i32_0 = arith.constant 0 : i32
    return %arg0, %c0_i32 : i32, i32
  }
}

module attributes {stable_mosaic.version = 11 : i64} {
  func.func @_conv_stats_kernel(%arg0: i32, %arg1: memref<256x72xbf16, #tpu.memory_space<vmem>>, %arg2: memref<72x8xbf16, #tpu.memory_space<vmem>>, %arg3: memref<256x8xf32, #tpu.memory_space<vmem>>, %arg4: memref<1x2x8xf32, #tpu.memory_space<vmem>>) attributes {dimension_semantics = [#tpu.dimension_semantics<parallel>], iteration_bounds = array<i64: 2>, scalar_prefetch = 0 : i64, scratch_operands = 0 : i64, tpu.core_type = #tpu.core_type<tc>, window_params = [{transform_indices = @transform_0, window_bounds = array<i64: 256, 72>}, {pipeline_mode = #tpu.pipeline_mode<synchronous>, transform_indices = @transform_1, window_bounds = array<i64: 72, 8>}, {transform_indices = @transform_2, window_bounds = array<i64: 256, 8>}, {transform_indices = @transform_3, window_bounds = array<i64: 1, 2, 8>}]} {
    %c0 = arith.constant 0 : index
    %c0_0 = arith.constant 0 : index
    %0 = vector.load %arg1[%c0, %c0_0] : memref<256x72xbf16, #tpu.memory_space<vmem>>, vector<256x72xbf16>
    %c0_1 = arith.constant 0 : index
    %c0_2 = arith.constant 0 : index
    %1 = vector.load %arg2[%c0_1, %c0_2] : memref<72x8xbf16, #tpu.memory_space<vmem>>, vector<72x8xbf16>
    %cst = arith.constant dense<0.000000e+00> : vector<256x8xf32>
    %2 = tpu.matmul %0, %1, %cst {dimension_numbers = #tpu.dot_dimension_numbers<[1], [0], [0], [1], [0, 0, 1, 1], [], []>} : vector<256x72xbf16>, vector<72x8xbf16>, vector<256x8xf32> -> vector<256x8xf32>
    %c0_3 = arith.constant 0 : index
    %c0_4 = arith.constant 0 : index
    %3 = vector.load %arg3[%c0_3, %c0_4] : memref<256x8xf32, #tpu.memory_space<vmem>>, vector<256x8xf32>
    tpu.vector_store %arg3[%c0_3, %c0_4], %2 {strides = array<i32>} : memref<256x8xf32, #tpu.memory_space<vmem>>, vector<256x8xf32>,
    %cst_5 = arith.constant dense<0.000000e+00> : vector<8xf32>
    %4 = vector.multi_reduction <add>, %2, %cst_5 [0] : vector<256x8xf32> to vector<8xf32>
    %5 = vector.shape_cast %4 : vector<8xf32> to vector<1x8xf32>
    %6 = arith.mulf %2, %2 : vector<256x8xf32>
    %cst_6 = arith.constant dense<0.000000e+00> : vector<8xf32>
    %7 = vector.multi_reduction <add>, %6, %cst_6 [0] : vector<256x8xf32> to vector<8xf32>
    %8 = vector.shape_cast %7 : vector<8xf32> to vector<1x8xf32>
    %9 = tpu.concatenate %5, %8 in 0 : vector<1x8xf32>, vector<1x8xf32> -> vector<2x8xf32>
    %10 = vector.shape_cast %9 : vector<2x8xf32> to vector<1x2x8xf32>
    %c0_7 = arith.constant 0 : index
    %c0_8 = arith.constant 0 : index
    %c0_9 = arith.constant 0 : index
    %11 = vector.load %arg4[%c0_7, %c0_8, %c0_9] : memref<1x2x8xf32, #tpu.memory_space<vmem>>, vector<1x2x8xf32>
    tpu.vector_store %arg4[%c0_7, %c0_8, %c0_9], %10 {strides = array<i32>} : memref<1x2x8xf32, #tpu.memory_space<vmem>>, vector<1x2x8xf32>,
    return
  }
  func.func @transform_0(%arg0: i32) -> (i32, i32) {
    %c0_i32 = arith.constant 0 : i32
    %c0_i32_0 = arith.constant 0 : i32
    return %arg0, %c0_i32 : i32, i32
  }
  func.func @transform_1(%arg0: i32) -> (i32, i32) {
    %c0_i32 = arith.constant 0 : i32
    %c0_i32_0 = arith.constant 0 : i32
    %c0_i32_1 = arith.constant 0 : i32
    return %c0_i32, %c0_i32_0 : i32, i32
  }
  func.func @transform_2(%arg0: i32) -> (i32, i32) {
    %c0_i32 = arith.constant 0 : i32
    %c0_i32_0 = arith.constant 0 : i32
    return %arg0, %c0_i32 : i32, i32
  }
  func.func @transform_3(%arg0: i32) -> (i32, i32, i32) {
    %c0_i32 = arith.constant 0 : i32
    %c0_i32_0 = arith.constant 0 : i32
    %c0_i32_1 = arith.constant 0 : i32
    return %arg0, %c0_i32, %c0_i32_0 : i32, i32, i32
  }
}

module attributes {stable_mosaic.version = 11 : i64} {
  func.func @_bn_relu_kernel(%arg0: i32, %arg1: memref<32x128xf32, #tpu.memory_space<vmem>>, %arg2: memref<1x128xf32, #tpu.memory_space<vmem>>, %arg3: memref<1x128xf32, #tpu.memory_space<vmem>>, %arg4: memref<32x128xf32, #tpu.memory_space<vmem>>) attributes {dimension_semantics = [#tpu.dimension_semantics<parallel>], iteration_bounds = array<i64: 1>, scalar_prefetch = 0 : i64, scratch_operands = 0 : i64, tpu.core_type = #tpu.core_type<tc>, window_params = [{transform_indices = @transform_0, window_bounds = array<i64: 32, 128>}, {pipeline_mode = #tpu.pipeline_mode<synchronous>, transform_indices = @transform_1, window_bounds = array<i64: 1, 128>}, {pipeline_mode = #tpu.pipeline_mode<synchronous>, transform_indices = @transform_2, window_bounds = array<i64: 1, 128>}, {transform_indices = @transform_3, window_bounds = array<i64: 32, 128>}]} {
    %c0 = arith.constant 0 : index
    %c0_0 = arith.constant 0 : index
    %0 = vector.load %arg1[%c0, %c0_0] : memref<32x128xf32, #tpu.memory_space<vmem>>, vector<32x128xf32>
    %c0_1 = arith.constant 0 : index
    %c0_2 = arith.constant 0 : index
    %1 = vector.load %arg2[%c0_1, %c0_2] : memref<1x128xf32, #tpu.memory_space<vmem>>, vector<1x128xf32>
    %2 = vector.broadcast %1 : vector<1x128xf32> to vector<32x128xf32>
    %3 = arith.mulf %0, %2 : vector<32x128xf32>
    %c0_3 = arith.constant 0 : index
    %c0_4 = arith.constant 0 : index
    %4 = vector.load %arg3[%c0_3, %c0_4] : memref<1x128xf32, #tpu.memory_space<vmem>>, vector<1x128xf32>
    %5 = vector.broadcast %4 : vector<1x128xf32> to vector<32x128xf32>
    %6 = arith.addf %3, %5 : vector<32x128xf32>
    %cst = arith.constant 0.000000e+00 : f32
    %7 = vector.broadcast %cst : f32 to vector<32x128xf32>
    %8 = arith.maximumf %6, %7 : vector<32x128xf32>
    %c0_5 = arith.constant 0 : index
    %c0_6 = arith.constant 0 : index
    %9 = vector.load %arg4[%c0_5, %c0_6] : memref<32x128xf32, #tpu.memory_space<vmem>>, vector<32x128xf32>
    tpu.vector_store %arg4[%c0_5, %c0_6], %8 {strides = array<i32>} : memref<32x128xf32, #tpu.memory_space<vmem>>, vector<32x128xf32>,
    return
  }
  func.func @transform_0(%arg0: i32) -> (i32, i32) {
    %c0_i32 = arith.constant 0 : i32
    %c0_i32_0 = arith.constant 0 : i32
    return %arg0, %c0_i32 : i32, i32
  }
  func.func @transform_1(%arg0: i32) -> (i32, i32) {
    %c0_i32 = arith.constant 0 : i32
    %c0_i32_0 = arith.constant 0 : i32
    %c0_i32_1 = arith.constant 0 : i32
    return %c0_i32, %c0_i32_0 : i32, i32
  }
  func.func @transform_2(%arg0: i32) -> (i32, i32) {
    %c0_i32 = arith.constant 0 : i32
    %c0_i32_0 = arith.constant 0 : i32
    %c0_i32_1 = arith.constant 0 : i32
    return %c0_i32, %c0_i32_0 : i32, i32
  }
  func.func @transform_3(%arg0: i32) -> (i32, i32) {
    %c0_i32 = arith.constant 0 : i32
    %c0_i32_0 = arith.constant 0 : i32
    return %arg0, %c0_i32 : i32, i32
  }
}

</mosaic_0001>

<llo_original>
// kernel: mul.9
$region0: #{mul.9}
  #allocation0 [shape = 's32[1]{0}', space=sflag, size = 0x4, scoped, tag = 'scoped memory for mul.9']
  %s0 = inlined_call_operand.vmem [shape: f32[8], index: 0, kind: input, shape index: {}]
  %s1 = inlined_call_operand.vmem [shape: f32[8], index: 1, kind: input, shape index: {}]
  %s2 = inlined_call_operand.vmem [shape: f32[8], index: 2, kind: output, shape index: {}]
  %v3 = vld [vmem:[%s0] sm:$0x1]
  %v4 = vld [vmem:[%s1] sm:$0x1]
  %5 = xla_tuple %v3, %v4
  %6 = xla_tuple %5
  %v7 = vmul.f32 %v3, %v4
  %8 = xla_tuple %v7
  %9 = vst [vmem:[%s2] sm:$0x1] %v7

// kernel: double_conv.4
$region0: #{double_conv.4}
  #allocation0 [shape = 'u32[]', space=smem, size = 0x4, offset = 0x4, fixed_abs, tag = 'smem constant byte address 0x4 - core index']
  #allocation1 [shape = 'u32[144,128]{1,0:T(1,128)}', space=vmem, size = 0x12000, scoped, tag = 'internal scratch']
  %s0 = inlined_call_operand.vmem [shape: bf16[512,36], index: 0, kind: input, shape index: {}]
  %s1 = inlined_call_operand.vmem [shape: bf16[36,8], index: 1, kind: input, shape index: {}]
  %s2 = inlined_call_operand.vmem [shape: f32[512,8], index: 2, kind: output, shape index: {0}]
  %s3 = inlined_call_operand.vmem [shape: f32[2,2,8], index: 3, kind: output, shape index: {1}]
  %4 = xla_tuple %s2, %s3
  %s5 = sld [smem:[#allocation0]]
  $region49: #{double_conv.4} parent=0
    _
  %s7 = ssub.s32 1, %s5
  %s8 = scalar_select 0, %s7, %s5
  loop: start=0, step=1, limit=4
  $region2: #{double_conv.4} parent=0 // loop_pre_header
    _
  $region3: #{double_conv.4} parent=0 // loop_header
    %s10 = sphi 0, %s14
    %p11 = scmp.ge.s32.totalorder %s10, 4
    %s20 = sphi 0, %s22
    %s23 = sphi 0, %s20
    %s24 = sphi 0, %s23
    %s40 = sphi 0, %s24
    %s44 = sphi 0, %s44
    %s46 = sphi 0, %s44
    %s47 = sphi 0, %s46
    %s61 = sphi 0, %s47
    %s67 = sphi 0, %s69
    %s70 = sphi 0, %s67
    %s71 = sphi 0, %s70
    %s87 = sphi 0, %s71
    %s93 = sphi 0, %s95
    %s96 = sphi 0, %s93
    %s97 = sphi 0, %s96
    %s113 = sphi 0, %s97
  $region4: #{double_conv.4} parent=0 // loop_header_branch
    %13 = sbr.rel (%p11) target = $region8
  $region5: #{double_conv.4} parent=0 // loop_body
    %s15 = ssub.s32 %s10, 1
    %s16 = ssub.s32 %s10, 2
    %s17 = sadd.s32 %s10, 1
    %s18 = ssub.s32 %s10, %s17
    %p19 = scmp.eq.s32.totalorder %s18, 0
    %s21 = sadd.s32 %s20, 1
    %s22 = scalar_select %p19, %s20, %s21
    %p25 = pneg %p19
    %p26 = scmp.eq.s32.totalorder %s10, 1
    %p27 = por %p25, %p26
    %p28 = scmp.ne.s32.totalorder %s20, %s23
    %p29 = scmp.eq.s32.totalorder %s10, 0
    %p30 = por %p28, %p29
    %p31 = scmp.ne.s32.totalorder %s20, %s23
    %p32 = scmp.eq.s32.totalorder %s15, 1
    %p33 = por %p31, %p32
    %p34 = scmp.ne.s32.totalorder %s23, %s24
    %p35 = scmp.eq.s32.totalorder %s15, 0
    %p36 = por %p34, %p35
    %p37 = scmp.ne.s32.totalorder %s23, %s24
    %p38 = scmp.eq.s32.totalorder %s16, 1
    %p39 = por %p37, %p38
    %p41 = scmp.ne.s32.totalorder %s24, %s40
    %p42 = scmp.eq.s32.totalorder %s16, 0
    %p43 = por %p41, %p42
    %s45 = sadd.s32 %s44, 1
    %p48 = scmp.eq.s32.totalorder %s10, 1
    %p49 = scmp.ne.s32.totalorder %s44, %s46
    %p50 = scmp.eq.s32.totalorder %s10, 0
    %p51 = por %p49, %p50
    %p52 = scmp.ne.s32.totalorder %s44, %s46
    %p53 = scmp.eq.s32.totalorder %s15, 1
    %p54 = por %p52, %p53
    %p55 = scmp.ne.s32.totalorder %s46, %s47
    %p56 = scmp.eq.s32.totalorder %s15, 0
    %p57 = por %p55, %p56
    %p58 = scmp.ne.s32.totalorder %s46, %s47
    %p59 = scmp.eq.s32.totalorder %s16, 1
    %p60 = por %p58, %p59
    %p62 = scmp.ne.s32.totalorder %s47, %s61
    %p63 = scmp.eq.s32.totalorder %s16, 0
    %p64 = por %p62, %p63
    %s65 = ssub.s32 %s10, %s17
    %p66 = scmp.eq.s32.totalorder %s65, 0
    %s68 = sadd.s32 %s67, 1
    %s69 = scalar_select %p66, %s67, %s68
    %p72 = pneg %p66
    %p73 = scmp.eq.s32.totalorder %s10, 1
    %p74 = por %p72, %p73
    %p75 = scmp.ne.s32.totalorder %s67, %s70
    %p76 = scmp.eq.s32.totalorder %s10, 0
    %p77 = por %p75, %p76
    %p78 = scmp.ne.s32.totalorder %s67, %s70
    %p79 = scmp.eq.s32.totalorder %s15, 1
    %p80 = por %p78, %p79
    %p81 = scmp.ne.s32.totalorder %s70, %s71
    %p82 = scmp.eq.s32.totalorder %s15, 0
    %p83 = por %p81, %p82
    %p84 = scmp.ne.s32.totalorder %s70, %s71
    %p85 = scmp.eq.s32.totalorder %s16, 1
    %p86 = por %p84, %p85
    %p88 = scmp.ne.s32.totalorder %s71, %s87
    %p89 = scmp.eq.s32.totalorder %s16, 0
    %p90 = por %p88, %p89
    %s91 = ssub.s32 %s10, %s17
    %p92 = scmp.eq.s32.totalorder %s91, 0
    %s94 = sadd.s32 %s93, 1
    %s95 = scalar_select %p92, %s93, %s94
    %p98 = pneg %p92
    %p99 = scmp.eq.s32.totalorder %s10, 1
    %p100 = por %p98, %p99
    %p101 = scmp.ne.s32.totalorder %s93, %s96
    %p102 = scmp.eq.s32.totalorder %s10, 0
    %p103 = por %p101, %p102
    %p104 = scmp.ne.s32.totalorder %s93, %s96
    %p105 = scmp.eq.s32.totalorder %s15, 1
    %p106 = por %p104, %p105
    %p107 = scmp.ne.s32.totalorder %s96, %s97
    %p108 = scmp.eq.s32.totalorder %s15, 0
    %p109 = por %p107, %p108
    %p110 = scmp.ne.s32.totalorder %s96, %s97
    %p111 = scmp.eq.s32.totalorder %s16, 1
    %p112 = por %p110, %p111
    %p114 = scmp.ne.s32.totalorder %s97, %s113
    %p115 = scmp.eq.s32.totalorder %s16, 0
    %p116 = por %p114, %p115
    %p117 = scmp.le.s32.totalorder 1, %s10
    %p118 = scmp.lt.s32.totalorder %s10, 3
    %p119 = pnand %p117, %p118
    %p120 = pneg %p119
    // Predicated region
    $region9: #{double_conv.4} parent=5 // pred_check
      _
    $region10: #{double_conv.4} parent=5 // pred_check_branch
      %122 = sbr.rel (%p119) target = $region12
    $region11: #{double_conv.4} parent=5 // pred_region
      %s123 = ssub.s32 %s10, 1
      // Predicated region
      $region13: #{double_conv.4} parent=11 // pred_check
        %p124 = pneg %p57
      $region14: #{double_conv.4} parent=11 // pred_check_branch
        %126 = sbr.rel (%p124) target = $region16
      $region15: #{double_conv.4} parent=11 // pred_region
        _
      $region16: #{double_conv.4} parent=11 // pred_fallthru
        _
    $region12: #{double_conv.4} parent=5 // pred_fallthru
      _
    %p127 = scmp.lt.s32.totalorder %s10, 2
    // Predicated region
    $region17: #{double_conv.4} parent=5 // pred_check
      %p128 = pneg %p127
    $region18: #{double_conv.4} parent=5 // pred_check_branch
      %130 = sbr.rel (%p128) target = $region20
    $region19: #{double_conv.4} parent=5 // pred_region
      // Predicated region
      $region21: #{double_conv.4} parent=19 // pred_check
        %p131 = pneg %p30
      $region22: #{double_conv.4} parent=19 // pred_check_branch
        %133 = sbr.rel (%p131) target = $region24
      $region23: #{double_conv.4} parent=19 // pred_region
        %s134 = smul.u32 32, %s10
        %p135 = scmp.lt.s32.totalorder %s134, 63
        %s136 = scalar_select %p135, %s134, 63
        %s137 = smul.addr %s136, 4
        %s138 = scalar_lea.vmem %s0, %s137
        %s139 = smul.u32 32, %s10
      $region24: #{double_conv.4} parent=19 // pred_fallthru
        _
    $region20: #{double_conv.4} parent=5 // pred_fallthru
      _
    %p140 = scmp.le.s32.totalorder 1, %s10
    %p141 = scmp.lt.s32.totalorder %s10, 3
    %p142 = pnand %p140, %p141
    %p143 = pneg %p142
    // Predicated region
    $region25: #{double_conv.4} parent=5 // pred_check
      _
    $region26: #{double_conv.4} parent=5 // pred_check_branch
      %145 = sbr.rel (%p142) target = $region28
    $region27: #{double_conv.4} parent=5 // pred_region
      %s146 = ssub.s32 %s10, 1
      %s147 = smul.u32 32, %s15
      %p148 = scmp.lt.s32.totalorder %s147, 63
      %s149 = scalar_select %p148, %s147, 63
      %s150 = smul.addr %s149, 4
      %s151 = scalar_lea.vmem %s0, %s150
      %p152 = pneg %p36
      %p153 = pneg %p33
      %p154 = pneg %p57
      %p155 = pneg %p54
      %p156 = pneg %p83
      %p157 = pneg %p80
      %s158 = smul.u32 32, %s15
      %p159 = scmp.lt.s32.totalorder %s158, 63
      %s160 = scalar_select %p159, %s158, 63
      %s161 = smul.addr %s160, 8
      %s162 = scalar_lea.vmem %s2, %s161
      %p163 = pneg %p109
      %p164 = pneg %p106
      %p165 = scmp.lt.s32.totalorder %s15, 1
      %s166 = scalar_select %p165, %s15, 1
      %s167 = smul.addr %s166, 2
      %s168 = scalar_lea.vmem %s3, %s167
      %s169 = smul.u32 32, %s15
      %p170 = scmp.lt.s32.totalorder %s169, 63
      %s171 = scalar_select %p170, %s169, 63
      %s172 = smul.addr %s171, 4
      %s173 = scalar_lea.vmem %s0, %s172
      %s174 = smul.u32 32, %s15
      %s175 = smul.u32 32, %s15
      %p176 = scmp.lt.s32.totalorder %s175, 63
      %s177 = scalar_select %p176, %s175, 63
      %s178 = smul.addr %s177, 8
      %s179 = scalar_lea.vmem %s2, %s178
      %s180 = smul.u32 32, %s15
      %p181 = scmp.lt.s32.totalorder %s15, 1
      %s182 = scalar_select %p181, %s15, 1
      %s183 = smul.addr %s182, 2
      %s184 = scalar_lea.vmem %s3, %s183
      %v186 = vld [vmem:[%s173] sm:$0xf]
      %v187 = vld [vmem:[%s173 + $0x4] sm:$0xf]
      %v188 = vld [vmem:[%s173 + $0x8] sm:$0xf]
      %v189 = vld [vmem:[%s173 + $0xc] sm:$0xf]
      %v190 = vld [vmem:[%s173 + $0x10] sm:$0xf]
      %v191 = vld [vmem:[%s173 + $0x14] sm:$0xf]
      %v192 = vld [vmem:[%s173 + $0x18] sm:$0xf]
      %v193 = vld [vmem:[%s173 + $0x1c] sm:$0xf]
      %v194 = vld [vmem:[%s173 + $0x20] sm:$0xf]
      %v195 = vld [vmem:[%s173 + $0x24] sm:$0xf]
      %v196 = vld [vmem:[%s173 + $0x28] sm:$0xf]
      %v197 = vld [vmem:[%s173 + $0x2c] sm:$0xf]
      %v198 = vld [vmem:[%s173 + $0x30] sm:$0xf]
      %v199 = vld [vmem:[%s173 + $0x34] sm:$0xf]
      %v200 = vld [vmem:[%s173 + $0x38] sm:$0xf]
      %v201 = vld [vmem:[%s173 + $0x3c] sm:$0xf]
      %v202 = vld [vmem:[%s173 + $0x40] sm:$0xf]
      %v203 = vld [vmem:[%s173 + $0x44] sm:$0xf]
      %v204 = vld [vmem:[%s173 + $0x48] sm:$0xf]
      %v205 = vld [vmem:[%s173 + $0x4c] sm:$0xf]
      %v206 = vld [vmem:[%s173 + $0x50] sm:$0xf]
      %v207 = vld [vmem:[%s173 + $0x54] sm:$0xf]
      %v208 = vld [vmem:[%s173 + $0x58] sm:$0xf]
      %v209 = vld [vmem:[%s173 + $0x5c] sm:$0xf]
      %v210 = vld [vmem:[%s173 + $0x60] sm:$0xf]
      %v211 = vld [vmem:[%s173 + $0x64] sm:$0xf]
      %v212 = vld [vmem:[%s173 + $0x68] sm:$0xf]
      %v213 = vld [vmem:[%s173 + $0x6c] sm:$0xf]
      %v214 = vld [vmem:[%s173 + $0x70] sm:$0xf]
      %v215 = vld [vmem:[%s173 + $0x74] sm:$0xf]
      %v216 = vld [vmem:[%s173 + $0x78] sm:$0xf]
      %v217 = vld [vmem:[%s173 + $0x7c] sm:$0xf]
      %v218 = vld [vmem:[%s1] sm:$0xf]
      %v219 = vld [vmem:[%s1 + $0x4] sm:$0xf]
      %v220 = vld [vmem:[%s1 + $0x8] sm:$0xf]
      %v221 = vld [vmem:[%s1 + $0xc] sm:$0xf]
      %v222 = vld [vmem:[%s1 + $0x10] sm:$0x3]
      %v255 = vunpack.c.l.b16 %v186
      %v256 = vunpack.c.l.b16 %v187
      %v257 = vunpack.c.l.b16 %v188
      %v258 = vunpack.c.l.b16 %v189
      %v259 = vunpack.c.l.b16 %v190
      %v260 = vunpack.c.l.b16 %v191
      %v261 = vunpack.c.l.b16 %v192
      %v262 = vunpack.c.l.b16 %v193
      %v263 = vunpack.c.l.b16 %v194
      %v264 = vunpack.c.l.b16 %v195
      %v265 = vunpack.c.l.b16 %v196
      %v266 = vunpack.c.l.b16 %v197
      %v267 = vunpack.c.l.b16 %v198
      %v268 = vunpack.c.l.b16 %v199
      %v269 = vunpack.c.l.b16 %v200
      %v270 = vunpack.c.l.b16 %v201
      %v271 = vunpack.c.l.b16 %v202
      %v272 = vunpack.c.l.b16 %v203
      %v273 = vunpack.c.l.b16 %v204
      %v274 = vunpack.c.l.b16 %v205
      %v275 = vunpack.c.l.b16 %v206
      %v276 = vunpack.c.l.b16 %v207
      %v277 = vunpack.c.l.b16 %v208
      %v278 = vunpack.c.l.b16 %v209
      %v279 = vunpack.c.l.b16 %v210
      %v280 = vunpack.c.l.b16 %v211
      %v281 = vunpack.c.l.b16 %v212
      %v282 = vunpack.c.l.b16 %v213
      %v283 = vunpack.c.l.b16 %v214
      %v284 = vunpack.c.l.b16 %v215
      %v285 = vunpack.c.l.b16 %v216
      %v286 = vunpack.c.l.b16 %v217
      %v287 = vpack.c.b16 %v256, %v255
      %v288 = vpack.c.b16 %v258, %v257
      %v289 = vpack.c.b16 %v260, %v259
      %v290 = vpack.c.b16 %v262, %v261
      %v291 = vpack.c.b16 %v264, %v263
      %v292 = vpack.c.b16 %v266, %v265
      %v293 = vpack.c.b16 %v268, %v267
      %v294 = vpack.c.b16 %v270, %v269
      %v295 = vpack.c.b16 %v272, %v271
      %v296 = vpack.c.b16 %v274, %v273
      %v297 = vpack.c.b16 %v276, %v275
      %v298 = vpack.c.b16 %v278, %v277
      %v299 = vpack.c.b16 %v280, %v279
      %v300 = vpack.c.b16 %v282, %v281
      %v301 = vpack.c.b16 %v284, %v283
      %v302 = vpack.c.b16 %v286, %v285
      %v308 = vunpack.c.l.b16 %v218
      %v309 = vunpack.c.l.b16 %v219
      %v310 = vunpack.c.l.b16 %v220
      %v311 = vunpack.c.l.b16 %v221
      %v312 = vunpack.c.l.b16 %v222
      %v313 = vpack.c.b16 %v309, %v308
      %v314 = vpack.c.b16 %v311, %v310
      %v315 = vpack.c.b16 %v312, %v312
      %vm318 = vcmask 293888
      %v320 = vsel %vm318, %v287, 0
      %v323 = vsel %vm318, %v288, 0
      %v326 = vsel %vm318, %v289, 0
      %v329 = vsel %vm318, %v290, 0
      %v332 = vsel %vm318, %v291, 0
      %v335 = vsel %vm318, %v292, 0
      %v338 = vsel %vm318, %v293, 0
      %v341 = vsel %vm318, %v294, 0
      %v344 = vsel %vm318, %v295, 0
      %v347 = vsel %vm318, %v296, 0
      %v350 = vsel %vm318, %v297, 0
      %v353 = vsel %vm318, %v298, 0
      %v356 = vsel %vm318, %v299, 0
      %v359 = vsel %vm318, %v300, 0
      %v362 = vsel %vm318, %v301, 0
      %v365 = vsel %vm318, %v302, 0
      %vm367 = vcmask 1041408
      %v369 = vsel %vm367, %v315, 0
      %371 = vmatprep.subr.bf16.mxu0 0
      %372 = vmatpush1.bf16.msra.mxu0 %v313
      %373 = vmatprep.subr.bf16.mxu0 0
      %374 = vmatpush1.bf16.msra.mxu0 %v314
      %375 = vmatprep.subr.bf16.mxu0 0
      %376 = vmatpush1.bf16.msra.mxu0 %v369
      %377 = vmatprep.subr.bf16.mxu0 0
      %378 = vmatpush1.bf16.msra.mxu0 0
      %379 = vmatprep.subr.bf16.mxu0 0
      %380 = vmatpush1.bf16.msra.mxu0 0
      %381 = vmatprep.subr.bf16.mxu0 0
      %382 = vmatpush1.bf16.msra.mxu0 0
      %383 = vmatprep.subr.bf16.mxu0 0
      %384 = vmatpush1.bf16.msra.mxu0 0
      %385 = vmatprep.subr.bf16.mxu0 0
      %386 = vmatpush1.bf16.msra.mxu0 0
      %387 = vmatprep.subr.bf16.mxu0 0
      %388 = vmatpush1.bf16.msra.mxu0 0
      %389 = vmatprep.subr.bf16.mxu0 0
      %390 = vmatpush1.bf16.msra.mxu0 0
      %391 = vmatprep.subr.bf16.mxu0 0
      %392 = vmatpush1.bf16.msra.mxu0 0
      %393 = vmatprep.subr.bf16.mxu0 0
      %394 = vmatpush1.bf16.msra.mxu0 0
      %395 = vmatprep.subr.bf16.mxu0 0
      %396 = vmatpush1.bf16.msra.mxu0 0
      %397 = vmatprep.subr.bf16.mxu0 0
      %398 = vmatpush1.bf16.msra.mxu0 0
      %399 = vmatprep.subr.bf16.mxu0 0
      %400 = vmatpush1.bf16.msra.mxu0 0
      %401 = vmatprep.subr.bf16.mxu0 0
      %402 = vmatpush1.bf16.msra.mxu0 0
      %403 = vmatprep.mubr.bf16.mxu0 0
      %404 = vmatmul.mubr.bf16.gmra.mrb[0].mxu0 %v320
      %v405 = vpop.f32.mrb[0].mxu0
      %v406 = vadd.f32 0.0, %v405
      %v407 = vpop.f32.mrb[0].mxu0
      %v408 = vpop.f32.mrb[0].mxu0
      %v409 = vadd.f32 0.0, %v408
      %v410 = vpop.f32.mrb[0].mxu0
      %411 = vmatprep.mubr.bf16.mxu0 0
      %412 = vmatmul.mubr.bf16.gmra.mrb[0].mxu0 %v323
      %v413 = vpop.f32.mrb[0].mxu0
      %v414 = vadd.f32 0.0, %v413
      %v415 = vpop.f32.mrb[0].mxu0
      %v416 = vpop.f32.mrb[0].mxu0
      %v417 = vadd.f32 0.0, %v416
      %v418 = vpop.f32.mrb[0].mxu0
      %419 = vmatprep.mubr.bf16.mxu0 0
      %420 = vmatmul.mubr.bf16.gmra.mrb[0].mxu0 %v326
      %v421 = vpop.f32.mrb[0].mxu0
      %v422 = vadd.f32 0.0, %v421
      %v423 = vpop.f32.mrb[0].mxu0
      %v424 = vpop.f32.mrb[0].mxu0
      %v425 = vadd.f32 0.0, %v424
      %v426 = vpop.f32.mrb[0].mxu0
      %427 = vmatprep.mubr.bf16.mxu0 0
      %428 = vmatmul.mubr.bf16.gmra.mrb[0].mxu0 %v329
      %v429 = vpop.f32.mrb[0].mxu0
      %v430 = vadd.f32 0.0, %v429
      %v431 = vpop.f32.mrb[0].mxu0
      %v432 = vpop.f32.mrb[0].mxu0
      %v433 = vadd.f32 0.0, %v432
      %v434 = vpop.f32.mrb[0].mxu0
      %435 = vmatprep.mubr.bf16.mxu0 0
      %436 = vmatmul.mubr.bf16.gmra.mrb[0].mxu0 %v332
      %v437 = vpop.f32.mrb[0].mxu0
      %v438 = vadd.f32 0.0, %v437
      %v439 = vpop.f32.mrb[0].mxu0
      %v440 = vpop.f32.mrb[0].mxu0
      %v441 = vadd.f32 0.0, %v440
      %v442 = vpop.f32.mrb[0].mxu0
      %443 = vmatprep.mubr.bf16.mxu0 0
      %444 = vmatmul.mubr.bf16.gmra.mrb[0].mxu0 %v335
      %v445 = vpop.f32.mrb[0].mxu0
      %v446 = vadd.f32 0.0, %v445
      %v447 = vpop.f32.mrb[0].mxu0
      %v448 = vpop.f32.mrb[0].mxu0
      %v449 = vadd.f32 0.0, %v448
      %v450 = vpop.f32.mrb[0].mxu0
      %451 = vmatprep.mubr.bf16.mxu0 0
      %452 = vmatmul.mubr.bf16.gmra.mrb[0].mxu0 %v338
      %v453 = vpop.f32.mrb[0].mxu0
      %v454 = vadd.f32 0.0, %v453
      %v455 = vpop.f32.mrb[0].mxu0
      %v456 = vpop.f32.mrb[0].mxu0
      %v457 = vadd.f32 0.0, %v456
      %v458 = vpop.f32.mrb[0].mxu0
      %459 = vmatprep.mubr.bf16.mxu0 0
      %460 = vmatmul.mubr.bf16.gmra.mrb[0].mxu0 %v341
      %v461 = vpop.f32.mrb[0].mxu0
      %v462 = vadd.f32 0.0, %v461
      %v463 = vpop.f32.mrb[0].mxu0
      %v464 = vpop.f32.mrb[0].mxu0
      %v465 = vadd.f32 0.0, %v464
      %v466 = vpop.f32.mrb[0].mxu0
      %467 = vmatprep.mubr.bf16.mxu0 0
      %468 = vmatmul.mubr.bf16.gmra.mrb[0].mxu0 %v344
      %v469 = vpop.f32.mrb[0].mxu0
      %v470 = vadd.f32 0.0, %v469
      %v471 = vpop.f32.mrb[0].mxu0
      %v472 = vpop.f32.mrb[0].mxu0
      %v473 = vadd.f32 0.0, %v472
      %v474 = vpop.f32.mrb[0].mxu0
      %475 = vmatprep.mubr.bf16.mxu0 0
      %476 = vmatmul.mubr.bf16.gmra.mrb[0].mxu0 %v347
      %v477 = vpop.f32.mrb[0].mxu0
      %v478 = vadd.f32 0.0, %v477
      %v479 = vpop.f32.mrb[0].mxu0
      %v480 = vpop.f32.mrb[0].mxu0
      %v481 = vadd.f32 0.0, %v480
      %v482 = vpop.f32.mrb[0].mxu0
      %483 = vmatprep.mubr.bf16.mxu0 0
      %484 = vmatmul.mubr.bf16.gmra.mrb[0].mxu0 %v350
      %v485 = vpop.f32.mrb[0].mxu0
      %v486 = vadd.f32 0.0, %v485
      %v487 = vpop.f32.mrb[0].mxu0
      %v488 = vpop.f32.mrb[0].mxu0
      %v489 = vadd.f32 0.0, %v488
      %v490 = vpop.f32.mrb[0].mxu0
      %491 = vmatprep.mubr.bf16.mxu0 0
      %492 = vmatmul.mubr.bf16.gmra.mrb[0].mxu0 %v353
      %v493 = vpop.f32.mrb[0].mxu0
      %v494 = vadd.f32 0.0, %v493
      %v495 = vpop.f32.mrb[0].mxu0
      %v496 = vpop.f32.mrb[0].mxu0
      %v497 = vadd.f32 0.0, %v496
      %v498 = vpop.f32.mrb[0].mxu0
      %499 = vmatprep.mubr.bf16.mxu0 0
      %500 = vmatmul.mubr.bf16.gmra.mrb[0].mxu0 %v356
      %v501 = vpop.f32.mrb[0].mxu0
      %v502 = vadd.f32 0.0, %v501
      %v503 = vpop.f32.mrb[0].mxu0
      %v504 = vpop.f32.mrb[0].mxu0
      %v505 = vadd.f32 0.0, %v504
      %v506 = vpop.f32.mrb[0].mxu0
      %507 = vmatprep.mubr.bf16.mxu0 0
      %508 = vmatmul.mubr.bf16.gmra.mrb[0].mxu0 %v359
      %v509 = vpop.f32.mrb[0].mxu0
      %v510 = vadd.f32 0.0, %v509
      %v511 = vpop.f32.mrb[0].mxu0
      %v512 = vpop.f32.mrb[0].mxu0
      %v513 = vadd.f32 0.0, %v512
      %v514 = vpop.f32.mrb[0].mxu0
      %515 = vmatprep.mubr.bf16.mxu0 0
      %516 = vmatmul.mubr.bf16.gmra.mrb[0].mxu0 %v362
      %v517 = vpop.f32.mrb[0].mxu0
      %v518 = vadd.f32 0.0, %v517
      %v519 = vpop.f32.mrb[0].mxu0
      %v520 = vpop.f32.mrb[0].mxu0
      %v521 = vadd.f32 0.0, %v520
      %v522 = vpop.f32.mrb[0].mxu0
      %523 = vmatprep.mubr.bf16.mxu0 0
      %524 = vmatmul.mubr.bf16.gmra.mrb[0].mxu0 %v365
      %v525 = vpop.f32.mrb[0].mxu0
      %v526 = vadd.f32 0.0, %v525
      %v527 = vpop.f32.mrb[0].mxu0
      %v528 = vpop.f32.mrb[0].mxu0
      %v529 = vadd.f32 0.0, %v528
      %v530 = vpop.f32.mrb[0].mxu0
      %531 = vdwg.mxu0
      %vm532 = vcmask 64512
      %533 = vst.msk [vmem:[%s179] sm:$0xff] %vm532, %v406
      %534 = vst.msk [vmem:[%s179 + $0x8] sm:$0xff] %vm532, %v409
      %535 = vst.msk [vmem:[%s179 + $0x10] sm:$0xff] %vm532, %v414
      %536 = vst.msk [vmem:[%s179 + $0x18] sm:$0xff] %vm532, %v417
      %537 = vst.msk [vmem:[%s179 + $0x20] sm:$0xff] %vm532, %v422
      %538 = vst.msk [vmem:[%s179 + $0x28] sm:$0xff] %vm532, %v425
      %539 = vst.msk [vmem:[%s179 + $0x30] sm:$0xff] %vm532, %v430
      %540 = vst.msk [vmem:[%s179 + $0x38] sm:$0xff] %vm532, %v433
      %541 = vst.msk [vmem:[%s179 + $0x40] sm:$0xff] %vm532, %v438
      %542 = vst.msk [vmem:[%s179 + $0x48] sm:$0xff] %vm532, %v441
      %543 = vst.msk [vmem:[%s179 + $0x50] sm:$0xff] %vm532, %v446
      %544 = vst.msk [vmem:[%s179 + $0x58] sm:$0xff] %vm532, %v449
      %545 = vst.msk [vmem:[%s179 + $0x60] sm:$0xff] %vm532, %v454
      %546 = vst.msk [vmem:[%s179 + $0x68] sm:$0xff] %vm532, %v457
      %547 = vst.msk [vmem:[%s179 + $0x70] sm:$0xff] %vm532, %v462
      %548 = vst.msk [vmem:[%s179 + $0x78] sm:$0xff] %vm532, %v465
      %549 = vst.msk [vmem:[%s179 + $0x80] sm:$0xff] %vm532, %v470
      %550 = vst.msk [vmem:[%s179 + $0x88] sm:$0xff] %vm532, %v473
      %551 = vst.msk [vmem:[%s179 + $0x90] sm:$0xff] %vm532, %v478
      %552 = vst.msk [vmem:[%s179 + $0x98] sm:$0xff] %vm532, %v481
      %553 = vst.msk [vmem:[%s179 + $0xa0] sm:$0xff] %vm532, %v486
      %554 = vst.msk [vmem:[%s179 + $0xa8] sm:$0xff] %vm532, %v489
      %555 = vst.msk [vmem:[%s179 + $0xb0] sm:$0xff] %vm532, %v494
      %556 = vst.msk [vmem:[%s179 + $0xb8] sm:$0xff] %vm532, %v497
      %557 = vst.msk [vmem:[%s179 + $0xc0] sm:$0xff] %vm532, %v502
      %558 = vst.msk [vmem:[%s179 + $0xc8] sm:$0xff] %vm532, %v505
      %559 = vst.msk [vmem:[%s179 + $0xd0] sm:$0xff] %vm532, %v510
      %560 = vst.msk [vmem:[%s179 + $0xd8] sm:$0xff] %vm532, %v513
      %561 = vst.msk [vmem:[%s179 + $0xe0] sm:$0xff] %vm532, %v518
      %562 = vst.msk [vmem:[%s179 + $0xe8] sm:$0xff] %vm532, %v521
      %563 = vst.msk [vmem:[%s179 + $0xf0] sm:$0xff] %vm532, %v526
      %564 = vst.msk [vmem:[%s179 + $0xf8] sm:$0xff] %vm532, %v529
      %v565 = vsel %vm532, %v406, 0.0
      %v566 = vsel %vm532, %v409, 0.0
      %v567 = vadd.f32 %v565, %v566
      %v568 = vsel %vm532, %v414, 0.0
      %v569 = vadd.f32 %v567, %v568
      %v570 = vsel %vm532, %v417, 0.0
      %v571 = vadd.f32 %v569, %v570
      %v572 = vsel %vm532, %v422, 0.0
      %v573 = vadd.f32 %v571, %v572
      %v574 = vsel %vm532, %v425, 0.0
      %v575 = vadd.f32 %v573, %v574
      %v576 = vsel %vm532, %v430, 0.0
      %v577 = vadd.f32 %v575, %v576
      %v578 = vsel %vm532, %v433, 0.0
      %v579 = vadd.f32 %v577, %v578
      %v580 = vsel %vm532, %v438, 0.0
      %v581 = vadd.f32 %v579, %v580
      %v582 = vsel %vm532, %v441, 0.0
      %v583 = vadd.f32 %v581, %v582
      %v584 = vsel %vm532, %v446, 0.0
      %v585 = vadd.f32 %v583, %v584
      %v586 = vsel %vm532, %v449, 0.0
      %v587 = vadd.f32 %v585, %v586
      %v588 = vsel %vm532, %v454, 0.0
      %v589 = vadd.f32 %v587, %v588
      %v590 = vsel %vm532, %v457, 0.0
      %v591 = vadd.f32 %v589, %v590
      %v592 = vsel %vm532, %v462, 0.0
      %v593 = vadd.f32 %v591, %v592
      %v594 = vsel %vm532, %v465, 0.0
      %v595 = vadd.f32 %v593, %v594
      %v596 = vsel %vm532, %v470, 0.0
      %v597 = vadd.f32 %v595, %v596
      %v598 = vsel %vm532, %v473, 0.0
      %v599 = vadd.f32 %v597, %v598
      %v600 = vsel %vm532, %v478, 0.0
      %v601 = vadd.f32 %v599, %v600
      %v602 = vsel %vm532, %v481, 0.0
      %v603 = vadd.f32 %v601, %v602
      %v604 = vsel %vm532, %v486, 0.0
      %v605 = vadd.f32 %v603, %v604
      %v606 = vsel %vm532, %v489, 0.0
      %v607 = vadd.f32 %v605, %v606
      %v608 = vsel %vm532, %v494, 0.0
      %v609 = vadd.f32 %v607, %v608
      %v610 = vsel %vm532, %v497, 0.0
      %v611 = vadd.f32 %v609, %v610
      %v612 = vsel %vm532, %v502, 0.0
      %v613 = vadd.f32 %v611, %v612
      %v614 = vsel %vm532, %v505, 0.0
      %v615 = vadd.f32 %v613, %v614
      %v616 = vsel %vm532, %v510, 0.0
      %v617 = vadd.f32 %v615, %v616
      %v618 = vsel %vm532, %v513, 0.0
      %v619 = vadd.f32 %v617, %v618
      %v620 = vsel %vm532, %v518, 0.0
      %v621 = vadd.f32 %v619, %v620
      %v622 = vsel %vm532, %v521, 0.0
      %v623 = vadd.f32 %v621, %v622
      %v624 = vsel %vm532, %v526, 0.0
      %v625 = vadd.f32 %v623, %v624
      %v626 = vsel %vm532, %v529, 0.0
      %v627 = vadd.f32 %v625, %v626
      %v628 = vrot.slane %v627, 4
      %v629 = vadd.f32 %v627, %v628
      %v630 = vrot.slane %v629, 2
      %v631 = vadd.f32 %v629, %v630
      %v632 = vrot.slane %v631, 1
      %v633 = vadd.f32 %v631, %v632
      %v634 = vmul.f32 %v406, %v406
      %v635 = vmul.f32 %v409, %v409
      %v636 = vmul.f32 %v414, %v414
      %v637 = vmul.f32 %v417, %v417
      %v638 = vmul.f32 %v422, %v422
      %v639 = vmul.f32 %v425, %v425
      %v640 = vmul.f32 %v430, %v430
      %v641 = vmul.f32 %v433, %v433
      %v642 = vmul.f32 %v438, %v438
      %v643 = vmul.f32 %v441, %v441
      %v644 = vmul.f32 %v446, %v446
      %v645 = vmul.f32 %v449, %v449
      %v646 = vmul.f32 %v454, %v454
      %v647 = vmul.f32 %v457, %v457
      %v648 = vmul.f32 %v462, %v462
      %v649 = vmul.f32 %v465, %v465
      %v650 = vmul.f32 %v470, %v470
      %v651 = vmul.f32 %v473, %v473
      %v652 = vmul.f32 %v478, %v478
      %v653 = vmul.f32 %v481, %v481
      %v654 = vmul.f32 %v486, %v486
      %v655 = vmul.f32 %v489, %v489
      %v656 = vmul.f32 %v494, %v494
      %v657 = vmul.f32 %v497, %v497
      %v658 = vmul.f32 %v502, %v502
      %v659 = vmul.f32 %v505, %v505
      %v660 = vmul.f32 %v510, %v510
      %v661 = vmul.f32 %v513, %v513
      %v662 = vmul.f32 %v518, %v518
      %v663 = vmul.f32 %v521, %v521
      %v664 = vmul.f32 %v526, %v526
      %v665 = vmul.f32 %v529, %v529
      %v666 = vsel %vm532, %v634, 0.0
      %v667 = vsel %vm532, %v635, 0.0
      %v668 = vadd.f32 %v666, %v667
      %v669 = vsel %vm532, %v636, 0.0
      %v670 = vadd.f32 %v668, %v669
      %v671 = vsel %vm532, %v637, 0.0
      %v672 = vadd.f32 %v670, %v671
      %v673 = vsel %vm532, %v638, 0.0
      %v674 = vadd.f32 %v672, %v673
      %v675 = vsel %vm532, %v639, 0.0
      %v676 = vadd.f32 %v674, %v675
      %v677 = vsel %vm532, %v640, 0.0
      %v678 = vadd.f32 %v676, %v677
      %v679 = vsel %vm532, %v641, 0.0
      %v680 = vadd.f32 %v678, %v679
      %v681 = vsel %vm532, %v642, 0.0
      %v682 = vadd.f32 %v680, %v681
      %v683 = vsel %vm532, %v643, 0.0
      %v684 = vadd.f32 %v682, %v683
      %v685 = vsel %vm532, %v644, 0.0
      %v686 = vadd.f32 %v684, %v685
      %v687 = vsel %vm532, %v645, 0.0
      %v688 = vadd.f32 %v686, %v687
      %v689 = vsel %vm532, %v646, 0.0
      %v690 = vadd.f32 %v688, %v689
      %v691 = vsel %vm532, %v647, 0.0
      %v692 = vadd.f32 %v690, %v691
      %v693 = vsel %vm532, %v648, 0.0
      %v694 = vadd.f32 %v692, %v693
      %v695 = vsel %vm532, %v649, 0.0
      %v696 = vadd.f32 %v694, %v695
      %v697 = vsel %vm532, %v650, 0.0
      %v698 = vadd.f32 %v696, %v697
      %v699 = vsel %vm532, %v651, 0.0
      %v700 = vadd.f32 %v698, %v699
      %v701 = vsel %vm532, %v652, 0.0
      %v702 = vadd.f32 %v700, %v701
      %v703 = vsel %vm532, %v653, 0.0
      %v704 = vadd.f32 %v702, %v703
      %v705 = vsel %vm532, %v654, 0.0
      %v706 = vadd.f32 %v704, %v705
      %v707 = vsel %vm532, %v655, 0.0
      %v708 = vadd.f32 %v706, %v707
      %v709 = vsel %vm532, %v656, 0.0
      %v710 = vadd.f32 %v708, %v709
      %v711 = vsel %vm532, %v657, 0.0
      %v712 = vadd.f32 %v710, %v711
      %v713 = vsel %vm532, %v658, 0.0
      %v714 = vadd.f32 %v712, %v713
      %v715 = vsel %vm532, %v659, 0.0
      %v716 = vadd.f32 %v714, %v715
      %v717 = vsel %vm532, %v660, 0.0
      %v718 = vadd.f32 %v716, %v717
      %v719 = vsel %vm532, %v661, 0.0
      %v720 = vadd.f32 %v718, %v719
      %v721 = vsel %vm532, %v662, 0.0
      %v722 = vadd.f32 %v720, %v721
      %v723 = vsel %vm532, %v663, 0.0
      %v724 = vadd.f32 %v722, %v723
      %v725 = vsel %vm532, %v664, 0.0
      %v726 = vadd.f32 %v724, %v725
      %v727 = vsel %vm532, %v665, 0.0
      %v728 = vadd.f32 %v726, %v727
      %v729 = vrot.slane %v728, 4
      %v730 = vadd.f32 %v728, %v729
      %v731 = vrot.slane %v730, 2
      %v732 = vadd.f32 %v730, %v731
      %v733 = vrot.slane %v732, 1
      %v734 = vadd.f32 %v732, %v733
      %vm735 = vcmask 1040384
      %v736 = vsel %vm735, %v633, %v734
      %vm737 = vcmask 58368
      %738 = vst.msk [vmem:[%s184] sm:$0x3] %vm737, %v736
      %s739 = smul.u32 32, %s15
      %p740 = scmp.lt.s32.totalorder %s739, 63
      %s741 = scalar_select %p740, %s739, 63
      %s742 = smul.addr %s741, 8
      %s743 = scalar_lea.vmem %s2, %s742
      %p744 = scmp.lt.s32.totalorder %s15, 1
      %s745 = scalar_select %p744, %s15, 1
      %s746 = smul.addr %s745, 2
      %s747 = scalar_lea.vmem %s3, %s746
      // Predicated region
      $region29: #{double_conv.4} parent=27 // pred_check
        %p748 = pneg %p80
      $region30: #{double_conv.4} parent=27 // pred_check_branch
        %750 = sbr.rel (%p748) target = $region32
      $region31: #{double_conv.4} parent=27 // pred_region
        %s751 = smul.u32 32, %s15
      $region32: #{double_conv.4} parent=27 // pred_fallthru
        _
      // Predicated region
      $region33: #{double_conv.4} parent=27 // pred_check
        %p752 = pneg %p106
      $region34: #{double_conv.4} parent=27 // pred_check_branch
        %754 = sbr.rel (%p752) target = $region36
      $region35: #{double_conv.4} parent=27 // pred_region
        _
      $region36: #{double_conv.4} parent=27 // pred_fallthru
        _
    $region28: #{double_conv.4} parent=5 // pred_fallthru
      _
    %p755 = scmp.le.s32.totalorder 2, %s10
    // Predicated region
    $region37: #{double_conv.4} parent=5 // pred_check
      %p756 = pneg %p755
    $region38: #{double_conv.4} parent=5 // pred_check_branch
      %758 = sbr.rel (%p756) target = $region40
    $region39: #{double_conv.4} parent=5 // pred_region
      %s759 = ssub.s32 %s10, 2
      // Predicated region
      $region41: #{double_conv.4} parent=39 // pred_check
        %p760 = pneg %p86
      $region42: #{double_conv.4} parent=39 // pred_check_branch
        %762 = sbr.rel (%p760) target = $region44
      $region43: #{double_conv.4} parent=39 // pred_region
        %s763 = smul.u32 32, %s16
        %p764 = scmp.lt.s32.totalorder %s763, 63
        %s765 = scalar_select %p764, %s763, 63
        %s766 = smul.addr %s765, 8
        %s767 = scalar_lea.vmem %s2, %s766
      $region44: #{double_conv.4} parent=39 // pred_fallthru
        _
      // Predicated region
      $region45: #{double_conv.4} parent=39 // pred_check
        %p768 = pneg %p112
      $region46: #{double_conv.4} parent=39 // pred_check_branch
        %770 = sbr.rel (%p768) target = $region48
      $region47: #{double_conv.4} parent=39 // pred_region
        %p771 = scmp.lt.s32.totalorder %s16, 1
        %s772 = scalar_select %p771, %s16, 1
        %s773 = smul.addr %s772, 2
        %s774 = scalar_lea.vmem %s3, %s773
      $region48: #{double_conv.4} parent=39 // pred_fallthru
        _
    $region40: #{double_conv.4} parent=5 // pred_fallthru
      _
  $region6: #{double_conv.4} parent=0 // loop_footer
    %s14 = sadd.s32 1, %s10
  $region7: #{double_conv.4} parent=0 // loop_footer_branch
    %9 = sbr.rel target = $region3
  $region8: #{double_conv.4} parent=0 // loop_exit
    _

// kernel: double_conv.5
$region0: #{double_conv.5}
  #allocation0 [shape = 'u32[]', space=smem, size = 0x4, offset = 0x4, fixed_abs, tag = 'smem constant byte address 0x4 - core index']
  #allocation1 [shape = 'u32[144,128]{1,0:T(1,128)}', space=vmem, size = 0x12000, scoped, tag = 'internal scratch']
  %s0 = inlined_call_operand.vmem [shape: f32[32,128], index: 0, kind: input, shape index: {}]
  %s1 = inlined_call_operand.vmem [shape: f32[1,128], index: 1, kind: input, shape index: {}]
  %s2 = inlined_call_operand.vmem [shape: f32[1,128], index: 2, kind: input, shape index: {}]
  %s3 = inlined_call_operand.vmem [shape: bf16[32,128], index: 3, kind: output, shape index: {}]
  %s4 = sld [smem:[#allocation0]]
  $region22: #{double_conv.5} parent=0
    _
  %s6 = ssub.s32 1, %s4
  %s7 = scalar_select 0, %s6, %s4
  // Predicated region
  $region2: #{double_conv.5} parent=0 // pred_check
    _
  $region3: #{double_conv.5} parent=0 // pred_check_branch
    %9 = sbr.rel (0) target = $region5
  $region4: #{double_conv.5} parent=0 // pred_region
    _
  $region5: #{double_conv.5} parent=0 // pred_fallthru
    _
  // Predicated region
  $region6: #{double_conv.5} parent=0 // pred_check
    _
  $region7: #{double_conv.5} parent=0 // pred_check_branch
    %11 = sbr.rel (0) target = $region9
  $region8: #{double_conv.5} parent=0 // pred_region
    _
  $region9: #{double_conv.5} parent=0 // pred_fallthru
    _
  // Predicated region
  $region10: #{double_conv.5} parent=0 // pred_check
    _
  $region11: #{double_conv.5} parent=0 // pred_check_branch
    %13 = sbr.rel (0) target = $region13
  $region12: #{double_conv.5} parent=0 // pred_region
    _
  $region13: #{double_conv.5} parent=0 // pred_fallthru
    _
  %v14 = vld [vmem:[%s0] sm:$0xff]
  %v15 = vld [vmem:[%s0 + $0x8] sm:$0xff]
  %v16 = vld [vmem:[%s0 + $0x10] sm:$0xff]
  %v17 = vld [vmem:[%s0 + $0x18] sm:$0xff]
  %v18 = vld [vmem:[%s1] sm:$0x1]
  %v20 = vlaneseq
  %v21 = vshrl.u32 %v20, 7
  %v22 = vsub.s32 0, %v21
  %v23 = vrot.slane %v18, %v22
  %v25 = vmul.f32 %v14, %v23
  %v26 = vmul.f32 %v15, %v23
  %v27 = vmul.f32 %v16, %v23
  %v28 = vmul.f32 %v17, %v23
  %v29 = vld [vmem:[%s2] sm:$0x1]
  %v31 = vlaneseq
  %v32 = vshrl.u32 %v31, 7
  %v33 = vsub.s32 0, %v32
  %v34 = vrot.slane %v29, %v33
  %v36 = vadd.f32 %v25, %v34
  %v37 = vadd.f32 %v26, %v34
  %v38 = vadd.f32 %v27, %v34
  %v39 = vadd.f32 %v28, %v34
  %v40 = vmax.f32 %v36, 0.0
  %v41 = vmax.f32 %v37, 0.0
  %v42 = vmax.f32 %v38, 0.0
  %v43 = vmax.f32 %v39, 0.0
  %v44 = vpack.c.bf16 %v41, %v40
  %v45 = vpack.c.bf16 %v43, %v42
  %v48 = vunpack.c.l.b16 %v44
  %v49 = vunpack.c.h.b16 %v44
  %v50 = vunpack.c.l.b16 %v45
  %v51 = vunpack.c.h.b16 %v45
  %v52 = vpack.c.b16 %v48, %v48
  %v53 = vpack.c.b16 %v49, %v49
  %v54 = vpack.c.b16 %v50, %v50
  %v55 = vpack.c.b16 %v51, %v51
  %60 = vst [vmem:[%s3] sm:$0xf] %v52
  %61 = vst [vmem:[%s3 + $0x4] sm:$0xf] %v53
  %62 = vst [vmem:[%s3 + $0x8] sm:$0xf] %v54
  %63 = vst [vmem:[%s3 + $0xc] sm:$0xf] %v55
  // Predicated region
  $region14: #{double_conv.5} parent=0 // pred_check
    _
  $region15: #{double_conv.5} parent=0 // pred_check_branch
    %65 = sbr.rel (0) target = $region17
  $region16: #{double_conv.5} parent=0 // pred_region
    _
  $region17: #{double_conv.5} parent=0 // pred_fallthru
    _
  // Predicated region
  $region18: #{double_conv.5} parent=0 // pred_check
    _
  $region19: #{double_conv.5} parent=0 // pred_check_branch
    %67 = sbr.rel (0) target = $region21
  $region20: #{double_conv.5} parent=0 // pred_region
    _
  $region21: #{double_conv.5} parent=0 // pred_fallthru
    _

// kernel: double_conv.7
$region0: #{double_conv.7}
  #allocation0 [shape = 'u32[]', space=smem, size = 0x4, offset = 0x4, fixed_abs, tag = 'smem constant byte address 0x4 - core index']
  #allocation1 [shape = 'u32[144,128]{1,0:T(1,128)}', space=vmem, size = 0x12000, scoped, tag = 'internal scratch']
  %s0 = inlined_call_operand.vmem [shape: f32[32,128], index: 0, kind: input, shape index: {}]
  %s1 = inlined_call_operand.vmem [shape: f32[1,128], index: 1, kind: input, shape index: {}]
  %s2 = inlined_call_operand.vmem [shape: f32[1,128], index: 2, kind: input, shape index: {}]
  %s3 = inlined_call_operand.vmem [shape: f32[32,128], index: 3, kind: output, shape index: {}]
  %s4 = sld [smem:[#allocation0]]
  $region22: #{double_conv.7} parent=0
    _
  %s6 = ssub.s32 1, %s4
  %s7 = scalar_select 0, %s6, %s4
  // Predicated region
  $region2: #{double_conv.7} parent=0 // pred_check
    _
  $region3: #{double_conv.7} parent=0 // pred_check_branch
    %9 = sbr.rel (0) target = $region5
  $region4: #{double_conv.7} parent=0 // pred_region
    _
  $region5: #{double_conv.7} parent=0 // pred_fallthru
    _
  // Predicated region
  $region6: #{double_conv.7} parent=0 // pred_check
    _
  $region7: #{double_conv.7} parent=0 // pred_check_branch
    %11 = sbr.rel (0) target = $region9
  $region8: #{double_conv.7} parent=0 // pred_region
    _
  $region9: #{double_conv.7} parent=0 // pred_fallthru
    _
  // Predicated region
  $region10: #{double_conv.7} parent=0 // pred_check
    _
  $region11: #{double_conv.7} parent=0 // pred_check_branch
    %13 = sbr.rel (0) target = $region13
  $region12: #{double_conv.7} parent=0 // pred_region
    _
  $region13: #{double_conv.7} parent=0 // pred_fallthru
    _
  %v14 = vld [vmem:[%s0] sm:$0xff]
  %v15 = vld [vmem:[%s0 + $0x8] sm:$0xff]
  %v16 = vld [vmem:[%s0 + $0x10] sm:$0xff]
  %v17 = vld [vmem:[%s0 + $0x18] sm:$0xff]
  %v18 = vld [vmem:[%s1] sm:$0x1]
  %v20 = vlaneseq
  %v21 = vshrl.u32 %v20, 7
  %v22 = vsub.s32 0, %v21
  %v23 = vrot.slane %v18, %v22
  %v25 = vmul.f32 %v14, %v23
  %v26 = vmul.f32 %v15, %v23
  %v27 = vmul.f32 %v16, %v23
  %v28 = vmul.f32 %v17, %v23
  %v29 = vld [vmem:[%s2] sm:$0x1]
  %v31 = vlaneseq
  %v32 = vshrl.u32 %v31, 7
  %v33 = vsub.s32 0, %v32
  %v34 = vrot.slane %v29, %v33
  %v36 = vadd.f32 %v25, %v34
  %v37 = vadd.f32 %v26, %v34
  %v38 = vadd.f32 %v27, %v34
  %v39 = vadd.f32 %v28, %v34
  %v40 = vmax.f32 %v36, 0.0
  %v41 = vmax.f32 %v37, 0.0
  %v42 = vmax.f32 %v38, 0.0
  %v43 = vmax.f32 %v39, 0.0
  %44 = vst [vmem:[%s3] sm:$0xff] %v40
  %45 = vst [vmem:[%s3 + $0x8] sm:$0xff] %v41
  %46 = vst [vmem:[%s3 + $0x10] sm:$0xff] %v42
  %47 = vst [vmem:[%s3 + $0x18] sm:$0xff] %v43
  // Predicated region
  $region14: #{double_conv.7} parent=0 // pred_check
    _
  $region15: #{double_conv.7} parent=0 // pred_check_branch
    %49 = sbr.rel (0) target = $region17
  $region16: #{double_conv.7} parent=0 // pred_region
    _
  $region17: #{double_conv.7} parent=0 // pred_fallthru
    _
  // Predicated region
  $region18: #{double_conv.7} parent=0 // pred_check
    _
  $region19: #{double_conv.7} parent=0 // pred_check_branch
    %51 = sbr.rel (0) target = $region21
  $region20: #{double_conv.7} parent=0 // pred_region
    _
  $region21: #{double_conv.7} parent=0 // pred_fallthru
    _

// kernel: double_conv.6
$region0: #{double_conv.6}
  #allocation0 [shape = 'u32[]', space=smem, size = 0x4, offset = 0x4, fixed_abs, tag = 'smem constant byte address 0x4 - core index']
  #allocation1 [shape = 'u32[144,128]{1,0:T(1,128)}', space=vmem, size = 0x12000, scoped, tag = 'internal scratch']
  %s0 = inlined_call_operand.vmem [shape: bf16[512,72], index: 0, kind: input, shape index: {}]
  %s1 = inlined_call_operand.vmem [shape: bf16[72,8], index: 1, kind: input, shape index: {}]
  %s2 = inlined_call_operand.vmem [shape: f32[512,8], index: 2, kind: output, shape index: {0}]
  %s3 = inlined_call_operand.vmem [shape: f32[2,2,8], index: 3, kind: output, shape index: {1}]
  %4 = xla_tuple %s2, %s3
  %s5 = sld [smem:[#allocation0]]
  $region49: #{double_conv.6} parent=0
    _
  %s7 = ssub.s32 1, %s5
  %s8 = scalar_select 0, %s7, %s5
  loop: start=0, step=1, limit=4
  $region2: #{double_conv.6} parent=0 // loop_pre_header
    _
  $region3: #{double_conv.6} parent=0 // loop_header
    %s10 = sphi 0, %s14
    %p11 = scmp.ge.s32.totalorder %s10, 4
    %s20 = sphi 0, %s22
    %s23 = sphi 0, %s20
    %s24 = sphi 0, %s23
    %s40 = sphi 0, %s24
    %s44 = sphi 0, %s44
    %s46 = sphi 0, %s44
    %s47 = sphi 0, %s46
    %s61 = sphi 0, %s47
    %s67 = sphi 0, %s69
    %s70 = sphi 0, %s67
    %s71 = sphi 0, %s70
    %s87 = sphi 0, %s71
    %s93 = sphi 0, %s95
    %s96 = sphi 0, %s93
    %s97 = sphi 0, %s96
    %s113 = sphi 0, %s97
  $region4: #{double_conv.6} parent=0 // loop_header_branch
    %13 = sbr.rel (%p11) target = $region8
  $region5: #{double_conv.6} parent=0 // loop_body
    %s15 = ssub.s32 %s10, 1
    %s16 = ssub.s32 %s10, 2
    %s17 = sadd.s32 %s10, 1
    %s18 = ssub.s32 %s10, %s17
    %p19 = scmp.eq.s32.totalorder %s18, 0
    %s21 = sadd.s32 %s20, 1
    %s22 = scalar_select %p19, %s20, %s21
    %p25 = pneg %p19
    %p26 = scmp.eq.s32.totalorder %s10, 1
    %p27 = por %p25, %p26
    %p28 = scmp.ne.s32.totalorder %s20, %s23
    %p29 = scmp.eq.s32.totalorder %s10, 0
    %p30 = por %p28, %p29
    %p31 = scmp.ne.s32.totalorder %s20, %s23
    %p32 = scmp.eq.s32.totalorder %s15, 1
    %p33 = por %p31, %p32
    %p34 = scmp.ne.s32.totalorder %s23, %s24
    %p35 = scmp.eq.s32.totalorder %s15, 0
    %p36 = por %p34, %p35
    %p37 = scmp.ne.s32.totalorder %s23, %s24
    %p38 = scmp.eq.s32.totalorder %s16, 1
    %p39 = por %p37, %p38
    %p41 = scmp.ne.s32.totalorder %s24, %s40
    %p42 = scmp.eq.s32.totalorder %s16, 0
    %p43 = por %p41, %p42
    %s45 = sadd.s32 %s44, 1
    %p48 = scmp.eq.s32.totalorder %s10, 1
    %p49 = scmp.ne.s32.totalorder %s44, %s46
    %p50 = scmp.eq.s32.totalorder %s10, 0
    %p51 = por %p49, %p50
    %p52 = scmp.ne.s32.totalorder %s44, %s46
    %p53 = scmp.eq.s32.totalorder %s15, 1
    %p54 = por %p52, %p53
    %p55 = scmp.ne.s32.totalorder %s46, %s47
    %p56 = scmp.eq.s32.totalorder %s15, 0
    %p57 = por %p55, %p56
    %p58 = scmp.ne.s32.totalorder %s46, %s47
    %p59 = scmp.eq.s32.totalorder %s16, 1
    %p60 = por %p58, %p59
    %p62 = scmp.ne.s32.totalorder %s47, %s61
    %p63 = scmp.eq.s32.totalorder %s16, 0
    %p64 = por %p62, %p63
    %s65 = ssub.s32 %s10, %s17
    %p66 = scmp.eq.s32.totalorder %s65, 0
    %s68 = sadd.s32 %s67, 1
    %s69 = scalar_select %p66, %s67, %s68
    %p72 = pneg %p66
    %p73 = scmp.eq.s32.totalorder %s10, 1
    %p74 = por %p72, %p73
    %p75 = scmp.ne.s32.totalorder %s67, %s70
    %p76 = scmp.eq.s32.totalorder %s10, 0
    %p77 = por %p75, %p76
    %p78 = scmp.ne.s32.totalorder %s67, %s70
    %p79 = scmp.eq.s32.totalorder %s15, 1
    %p80 = por %p78, %p79
    %p81 = scmp.ne.s32.totalorder %s70, %s71
    %p82 = scmp.eq.s32.totalorder %s15, 0
    %p83 = por %p81, %p82
    %p84 = scmp.ne.s32.totalorder %s70, %s71
    %p85 = scmp.eq.s32.totalorder %s16, 1
    %p86 = por %p84, %p85
    %p88 = scmp.ne.s32.totalorder %s71, %s87
    %p89 = scmp.eq.s32.totalorder %s16, 0
    %p90 = por %p88, %p89
    %s91 = ssub.s32 %s10, %s17
    %p92 = scmp.eq.s32.totalorder %s91, 0
    %s94 = sadd.s32 %s93, 1
    %s95 = scalar_select %p92, %s93, %s94
    %p98 = pneg %p92
    %p99 = scmp.eq.s32.totalorder %s10, 1
    %p100 = por %p98, %p99
    %p101 = scmp.ne.s32.totalorder %s93, %s96
    %p102 = scmp.eq.s32.totalorder %s10, 0
    %p103 = por %p101, %p102
    %p104 = scmp.ne.s32.totalorder %s93, %s96
    %p105 = scmp.eq.s32.totalorder %s15, 1
    %p106 = por %p104, %p105
    %p107 = scmp.ne.s32.totalorder %s96, %s97
    %p108 = scmp.eq.s32.totalorder %s15, 0
    %p109 = por %p107, %p108
    %p110 = scmp.ne.s32.totalorder %s96, %s97
    %p111 = scmp.eq.s32.totalorder %s16, 1
    %p112 = por %p110, %p111
    %p114 = scmp.ne.s32.totalorder %s97, %s113
    %p115 = scmp.eq.s32.totalorder %s16, 0
    %p116 = por %p114, %p115
    %p117 = scmp.le.s32.totalorder 1, %s10
    %p118 = scmp.lt.s32.totalorder %s10, 3
    %p119 = pnand %p117, %p118
    %p120 = pneg %p119
    // Predicated region
    $region9: #{double_conv.6} parent=5 // pred_check
      _
    $region10: #{double_conv.6} parent=5 // pred_check_branch
      %122 = sbr.rel (%p119) target = $region12
    $region11: #{double_conv.6} parent=5 // pred_region
      %s123 = ssub.s32 %s10, 1
      // Predicated region
      $region13: #{double_conv.6} parent=11 // pred_check
        %p124 = pneg %p57
      $region14: #{double_conv.6} parent=11 // pred_check_branch
        %126 = sbr.rel (%p124) target = $region16
      $region15: #{double_conv.6} parent=11 // pred_region
        _
      $region16: #{double_conv.6} parent=11 // pred_fallthru
        _
    $region12: #{double_conv.6} parent=5 // pred_fallthru
      _
    %p127 = scmp.lt.s32.totalorder %s10, 2
    // Predicated region
    $region17: #{double_conv.6} parent=5 // pred_check
      %p128 = pneg %p127
    $region18: #{double_conv.6} parent=5 // pred_check_branch
      %130 = sbr.rel (%p128) target = $region20
    $region19: #{double_conv.6} parent=5 // pred_region
      // Predicated region
      $region21: #{double_conv.6} parent=19 // pred_check
        %p131 = pneg %p30
      $region22: #{double_conv.6} parent=19 // pred_check_branch
        %133 = sbr.rel (%p131) target = $region24
      $region23: #{double_conv.6} parent=19 // pred_region
        %s134 = smul.u32 32, %s10
        %p135 = scmp.lt.s32.totalorder %s134, 63
        %s136 = scalar_select %p135, %s134, 63
        %s137 = smul.addr %s136, 4
        %s138 = scalar_lea.vmem %s0, %s137
        %s139 = smul.u32 32, %s10
      $region24: #{double_conv.6} parent=19 // pred_fallthru
        _
    $region20: #{double_conv.6} parent=5 // pred_fallthru
      _
    %p140 = scmp.le.s32.totalorder 1, %s10
    %p141 = scmp.lt.s32.totalorder %s10, 3
    %p142 = pnand %p140, %p141
    %p143 = pneg %p142
    // Predicated region
    $region25: #{double_conv.6} parent=5 // pred_check
      _
    $region26: #{double_conv.6} parent=5 // pred_check_branch
      %145 = sbr.rel (%p142) target = $region28
    $region27: #{double_conv.6} parent=5 // pred_region
      %s146 = ssub.s32 %s10, 1
      %s147 = smul.u32 32, %s15
      %p148 = scmp.lt.s32.totalorder %s147, 63
      %s149 = scalar_select %p148, %s147, 63
      %s150 = smul.addr %s149, 4
      %s151 = scalar_lea.vmem %s0, %s150
      %p152 = pneg %p36
      %p153 = pneg %p33
      %p154 = pneg %p57
      %p155 = pneg %p54
      %p156 = pneg %p83
      %p157 = pneg %p80
      %s158 = smul.u32 32, %s15
      %p159 = scmp.lt.s32.totalorder %s158, 63
      %s160 = scalar_select %p159, %s158, 63
      %s161 = smul.addr %s160, 8
      %s162 = scalar_lea.vmem %s2, %s161
      %p163 = pneg %p109
      %p164 = pneg %p106
      %p165 = scmp.lt.s32.totalorder %s15, 1
      %s166 = scalar_select %p165, %s15, 1
      %s167 = smul.addr %s166, 2
      %s168 = scalar_lea.vmem %s3, %s167
      %s169 = smul.u32 32, %s15
      %p170 = scmp.lt.s32.totalorder %s169, 63
      %s171 = scalar_select %p170, %s169, 63
      %s172 = smul.addr %s171, 4
      %s173 = scalar_lea.vmem %s0, %s172
      %s174 = smul.u32 32, %s15
      %s175 = smul.u32 32, %s15
      %p176 = scmp.lt.s32.totalorder %s175, 63
      %s177 = scalar_select %p176, %s175, 63
      %s178 = smul.addr %s177, 8
      %s179 = scalar_lea.vmem %s2, %s178
      %s180 = smul.u32 32, %s15
      %p181 = scmp.lt.s32.totalorder %s15, 1
      %s182 = scalar_select %p181, %s15, 1
      %s183 = smul.addr %s182, 2
      %s184 = scalar_lea.vmem %s3, %s183
      %v186 = vld [vmem:[%s173] sm:$0xf]
      %v187 = vld [vmem:[%s173 + $0x4] sm:$0xf]
      %v188 = vld [vmem:[%s173 + $0x8] sm:$0xf]
      %v189 = vld [vmem:[%s173 + $0xc] sm:$0xf]
      %v190 = vld [vmem:[%s173 + $0x10] sm:$0xf]
      %v191 = vld [vmem:[%s173 + $0x14] sm:$0xf]
      %v192 = vld [vmem:[%s173 + $0x18] sm:$0xf]
      %v193 = vld [vmem:[%s173 + $0x1c] sm:$0xf]
      %v194 = vld [vmem:[%s173 + $0x20] sm:$0xf]
      %v195 = vld [vmem:[%s173 + $0x24] sm:$0xf]
      %v196 = vld [vmem:[%s173 + $0x28] sm:$0xf]
      %v197 = vld [vmem:[%s173 + $0x2c] sm:$0xf]
      %v198 = vld [vmem:[%s173 + $0x30] sm:$0xf]
      %v199 = vld [vmem:[%s173 + $0x34] sm:$0xf]
      %v200 = vld [vmem:[%s173 + $0x38] sm:$0xf]
      %v201 = vld [vmem:[%s173 + $0x3c] sm:$0xf]
      %v202 = vld [vmem:[%s173 + $0x40] sm:$0xf]
      %v203 = vld [vmem:[%s173 + $0x44] sm:$0xf]
      %v204 = vld [vmem:[%s173 + $0x48] sm:$0xf]
      %v205 = vld [vmem:[%s173 + $0x4c] sm:$0xf]
      %v206 = vld [vmem:[%s173 + $0x50] sm:$0xf]
      %v207 = vld [vmem:[%s173 + $0x54] sm:$0xf]
      %v208 = vld [vmem:[%s173 + $0x58] sm:$0xf]
      %v209 = vld [vmem:[%s173 + $0x5c] sm:$0xf]
      %v210 = vld [vmem:[%s173 + $0x60] sm:$0xf]
      %v211 = vld [vmem:[%s173 + $0x64] sm:$0xf]
      %v212 = vld [vmem:[%s173 + $0x68] sm:$0xf]
      %v213 = vld [vmem:[%s173 + $0x6c] sm:$0xf]
      %v214 = vld [vmem:[%s173 + $0x70] sm:$0xf]
      %v215 = vld [vmem:[%s173 + $0x74] sm:$0xf]
      %v216 = vld [vmem:[%s173 + $0x78] sm:$0xf]
      %v217 = vld [vmem:[%s173 + $0x7c] sm:$0xf]
      %v218 = vld [vmem:[%s1] sm:$0xf]
      %v219 = vld [vmem:[%s1 + $0x4] sm:$0xf]
      %v220 = vld [vmem:[%s1 + $0x8] sm:$0xf]
      %v221 = vld [vmem:[%s1 + $0xc] sm:$0xf]
      %v222 = vld [vmem:[%s1 + $0x10] sm:$0xf]
      %v223 = vld [vmem:[%s1 + $0x14] sm:$0xf]
      %v224 = vld [vmem:[%s1 + $0x18] sm:$0xf]
      %v225 = vld [vmem:[%s1 + $0x1c] sm:$0xf]
      %v226 = vld [vmem:[%s1 + $0x20] sm:$0xf]
      %v259 = vunpack.c.l.b16 %v186
      %v260 = vunpack.c.l.b16 %v187
      %v261 = vunpack.c.l.b16 %v188
      %v262 = vunpack.c.l.b16 %v189
      %v263 = vunpack.c.l.b16 %v190
      %v264 = vunpack.c.l.b16 %v191
      %v265 = vunpack.c.l.b16 %v192
      %v266 = vunpack.c.l.b16 %v193
      %v267 = vunpack.c.l.b16 %v194
      %v268 = vunpack.c.l.b16 %v195
      %v269 = vunpack.c.l.b16 %v196
      %v270 = vunpack.c.l.b16 %v197
      %v271 = vunpack.c.l.b16 %v198
      %v272 = vunpack.c.l.b16 %v199
      %v273 = vunpack.c.l.b16 %v200
      %v274 = vunpack.c.l.b16 %v201
      %v275 = vunpack.c.l.b16 %v202
      %v276 = vunpack.c.l.b16 %v203
      %v277 = vunpack.c.l.b16 %v204
      %v278 = vunpack.c.l.b16 %v205
      %v279 = vunpack.c.l.b16 %v206
      %v280 = vunpack.c.l.b16 %v207
      %v281 = vunpack.c.l.b16 %v208
      %v282 = vunpack.c.l.b16 %v209
      %v283 = vunpack.c.l.b16 %v210
      %v284 = vunpack.c.l.b16 %v211
      %v285 = vunpack.c.l.b16 %v212
      %v286 = vunpack.c.l.b16 %v213
      %v287 = vunpack.c.l.b16 %v214
      %v288 = vunpack.c.l.b16 %v215
      %v289 = vunpack.c.l.b16 %v216
      %v290 = vunpack.c.l.b16 %v217
      %v291 = vpack.c.b16 %v260, %v259
      %v292 = vpack.c.b16 %v262, %v261
      %v293 = vpack.c.b16 %v264, %v263
      %v294 = vpack.c.b16 %v266, %v265
      %v295 = vpack.c.b16 %v268, %v267
      %v296 = vpack.c.b16 %v270, %v269
      %v297 = vpack.c.b16 %v272, %v271
      %v298 = vpack.c.b16 %v274, %v273
      %v299 = vpack.c.b16 %v276, %v275
      %v300 = vpack.c.b16 %v278, %v277
      %v301 = vpack.c.b16 %v280, %v279
      %v302 = vpack.c.b16 %v282, %v281
      %v303 = vpack.c.b16 %v284, %v283
      %v304 = vpack.c.b16 %v286, %v285
      %v305 = vpack.c.b16 %v288, %v287
      %v306 = vpack.c.b16 %v290, %v289
      %v316 = vunpack.c.l.b16 %v218
      %v317 = vunpack.c.l.b16 %v219
      %v318 = vunpack.c.l.b16 %v220
      %v319 = vunpack.c.l.b16 %v221
      %v320 = vunpack.c.l.b16 %v222
      %v321 = vunpack.c.l.b16 %v223
      %v322 = vunpack.c.l.b16 %v224
      %v323 = vunpack.c.l.b16 %v225
      %v324 = vunpack.c.l.b16 %v226
      %v325 = vpack.c.b16 %v317, %v316
      %v326 = vpack.c.b16 %v319, %v318
      %v327 = vpack.c.b16 %v321, %v320
      %v328 = vpack.c.b16 %v323, %v322
      %v329 = vpack.c.b16 %v324, %v324
      %vm334 = vcmask 588800
      %v336 = vsel %vm334, %v291, 0
      %v339 = vsel %vm334, %v292, 0
      %v342 = vsel %vm334, %v293, 0
      %v345 = vsel %vm334, %v294, 0
      %v348 = vsel %vm334, %v295, 0
      %v351 = vsel %vm334, %v296, 0
      %v354 = vsel %vm334, %v297, 0
      %v357 = vsel %vm334, %v298, 0
      %v360 = vsel %vm334, %v299, 0
      %v363 = vsel %vm334, %v300, 0
      %v366 = vsel %vm334, %v301, 0
      %v369 = vsel %vm334, %v302, 0
      %v372 = vsel %vm334, %v303, 0
      %v375 = vsel %vm334, %v304, 0
      %v378 = vsel %vm334, %v305, 0
      %v381 = vsel %vm334, %v306, 0
      %vm383 = vcmask 1043456
      %v385 = vsel %vm383, %v329, 0
      %387 = vmatprep.subr.bf16.mxu0 0
      %388 = vmatpush1.bf16.msra.mxu0 %v325
      %389 = vmatprep.subr.bf16.mxu0 0
      %390 = vmatpush1.bf16.msra.mxu0 %v326
      %391 = vmatprep.subr.bf16.mxu0 0
      %392 = vmatpush1.bf16.msra.mxu0 %v327
      %393 = vmatprep.subr.bf16.mxu0 0
      %394 = vmatpush1.bf16.msra.mxu0 %v328
      %395 = vmatprep.subr.bf16.mxu0 0
      %396 = vmatpush1.bf16.msra.mxu0 %v385
      %397 = vmatprep.subr.bf16.mxu0 0
      %398 = vmatpush1.bf16.msra.mxu0 0
      %399 = vmatprep.subr.bf16.mxu0 0
      %400 = vmatpush1.bf16.msra.mxu0 0
      %401 = vmatprep.subr.bf16.mxu0 0
      %402 = vmatpush1.bf16.msra.mxu0 0
      %403 = vmatprep.subr.bf16.mxu0 0
      %404 = vmatpush1.bf16.msra.mxu0 0
      %405 = vmatprep.subr.bf16.mxu0 0
      %406 = vmatpush1.bf16.msra.mxu0 0
      %407 = vmatprep.subr.bf16.mxu0 0
      %408 = vmatpush1.bf16.msra.mxu0 0
      %409 = vmatprep.subr.bf16.mxu0 0
      %410 = vmatpush1.bf16.msra.mxu0 0
      %411 = vmatprep.subr.bf16.mxu0 0
      %412 = vmatpush1.bf16.msra.mxu0 0
      %413 = vmatprep.subr.bf16.mxu0 0
      %414 = vmatpush1.bf16.msra.mxu0 0
      %415 = vmatprep.subr.bf16.mxu0 0
      %416 = vmatpush1.bf16.msra.mxu0 0
      %417 = vmatprep.subr.bf16.mxu0 0
      %418 = vmatpush1.bf16.msra.mxu0 0
      %419 = vmatprep.mubr.bf16.mxu0 0
      %420 = vmatmul.mubr.bf16.gmra.mrb[0].mxu0 %v336
      %v421 = vpop.f32.mrb[0].mxu0
      %v422 = vadd.f32 0.0, %v421
      %v423 = vpop.f32.mrb[0].mxu0
      %v424 = vpop.f32.mrb[0].mxu0
      %v425 = vadd.f32 0.0, %v424
      %v426 = vpop.f32.mrb[0].mxu0
      %427 = vmatprep.mubr.bf16.mxu0 0
      %428 = vmatmul.mubr.bf16.gmra.mrb[0].mxu0 %v339
      %v429 = vpop.f32.mrb[0].mxu0
      %v430 = vadd.f32 0.0, %v429
      %v431 = vpop.f32.mrb[0].mxu0
      %v432 = vpop.f32.mrb[0].mxu0
      %v433 = vadd.f32 0.0, %v432
      %v434 = vpop.f32.mrb[0].mxu0
      %435 = vmatprep.mubr.bf16.mxu0 0
      %436 = vmatmul.mubr.bf16.gmra.mrb[0].mxu0 %v342
      %v437 = vpop.f32.mrb[0].mxu0
      %v438 = vadd.f32 0.0, %v437
      %v439 = vpop.f32.mrb[0].mxu0
      %v440 = vpop.f32.mrb[0].mxu0
      %v441 = vadd.f32 0.0, %v440
      %v442 = vpop.f32.mrb[0].mxu0
      %443 = vmatprep.mubr.bf16.mxu0 0
      %444 = vmatmul.mubr.bf16.gmra.mrb[0].mxu0 %v345
      %v445 = vpop.f32.mrb[0].mxu0
      %v446 = vadd.f32 0.0, %v445
      %v447 = vpop.f32.mrb[0].mxu0
      %v448 = vpop.f32.mrb[0].mxu0
      %v449 = vadd.f32 0.0, %v448
      %v450 = vpop.f32.mrb[0].mxu0
      %451 = vmatprep.mubr.bf16.mxu0 0
      %452 = vmatmul.mubr.bf16.gmra.mrb[0].mxu0 %v348
      %v453 = vpop.f32.mrb[0].mxu0
      %v454 = vadd.f32 0.0, %v453
      %v455 = vpop.f32.mrb[0].mxu0
      %v456 = vpop.f32.mrb[0].mxu0
      %v457 = vadd.f32 0.0, %v456
      %v458 = vpop.f32.mrb[0].mxu0
      %459 = vmatprep.mubr.bf16.mxu0 0
      %460 = vmatmul.mubr.bf16.gmra.mrb[0].mxu0 %v351
      %v461 = vpop.f32.mrb[0].mxu0
      %v462 = vadd.f32 0.0, %v461
      %v463 = vpop.f32.mrb[0].mxu0
      %v464 = vpop.f32.mrb[0].mxu0
      %v465 = vadd.f32 0.0, %v464
      %v466 = vpop.f32.mrb[0].mxu0
      %467 = vmatprep.mubr.bf16.mxu0 0
      %468 = vmatmul.mubr.bf16.gmra.mrb[0].mxu0 %v354
      %v469 = vpop.f32.mrb[0].mxu0
      %v470 = vadd.f32 0.0, %v469
      %v471 = vpop.f32.mrb[0].mxu0
      %v472 = vpop.f32.mrb[0].mxu0
      %v473 = vadd.f32 0.0, %v472
      %v474 = vpop.f32.mrb[0].mxu0
      %475 = vmatprep.mubr.bf16.mxu0 0
      %476 = vmatmul.mubr.bf16.gmra.mrb[0].mxu0 %v357
      %v477 = vpop.f32.mrb[0].mxu0
      %v478 = vadd.f32 0.0, %v477
      %v479 = vpop.f32.mrb[0].mxu0
      %v480 = vpop.f32.mrb[0].mxu0
      %v481 = vadd.f32 0.0, %v480
      %v482 = vpop.f32.mrb[0].mxu0
      %483 = vmatprep.mubr.bf16.mxu0 0
      %484 = vmatmul.mubr.bf16.gmra.mrb[0].mxu0 %v360
      %v485 = vpop.f32.mrb[0].mxu0
      %v486 = vadd.f32 0.0, %v485
      %v487 = vpop.f32.mrb[0].mxu0
      %v488 = vpop.f32.mrb[0].mxu0
      %v489 = vadd.f32 0.0, %v488
      %v490 = vpop.f32.mrb[0].mxu0
      %491 = vmatprep.mubr.bf16.mxu0 0
      %492 = vmatmul.mubr.bf16.gmra.mrb[0].mxu0 %v363
      %v493 = vpop.f32.mrb[0].mxu0
      %v494 = vadd.f32 0.0, %v493
      %v495 = vpop.f32.mrb[0].mxu0
      %v496 = vpop.f32.mrb[0].mxu0
      %v497 = vadd.f32 0.0, %v496
      %v498 = vpop.f32.mrb[0].mxu0
      %499 = vmatprep.mubr.bf16.mxu0 0
      %500 = vmatmul.mubr.bf16.gmra.mrb[0].mxu0 %v366
      %v501 = vpop.f32.mrb[0].mxu0
      %v502 = vadd.f32 0.0, %v501
      %v503 = vpop.f32.mrb[0].mxu0
      %v504 = vpop.f32.mrb[0].mxu0
      %v505 = vadd.f32 0.0, %v504
      %v506 = vpop.f32.mrb[0].mxu0
      %507 = vmatprep.mubr.bf16.mxu0 0
      %508 = vmatmul.mubr.bf16.gmra.mrb[0].mxu0 %v369
      %v509 = vpop.f32.mrb[0].mxu0
      %v510 = vadd.f32 0.0, %v509
      %v511 = vpop.f32.mrb[0].mxu0
      %v512 = vpop.f32.mrb[0].mxu0
      %v513 = vadd.f32 0.0, %v512
      %v514 = vpop.f32.mrb[0].mxu0
      %515 = vmatprep.mubr.bf16.mxu0 0
      %516 = vmatmul.mubr.bf16.gmra.mrb[0].mxu0 %v372
      %v517 = vpop.f32.mrb[0].mxu0
      %v518 = vadd.f32 0.0, %v517
      %v519 = vpop.f32.mrb[0].mxu0
      %v520 = vpop.f32.mrb[0].mxu0
      %v521 = vadd.f32 0.0, %v520
      %v522 = vpop.f32.mrb[0].mxu0
      %523 = vmatprep.mubr.bf16.mxu0 0
      %524 = vmatmul.mubr.bf16.gmra.mrb[0].mxu0 %v375
      %v525 = vpop.f32.mrb[0].mxu0
      %v526 = vadd.f32 0.0, %v525
      %v527 = vpop.f32.mrb[0].mxu0
      %v528 = vpop.f32.mrb[0].mxu0
      %v529 = vadd.f32 0.0, %v528
      %v530 = vpop.f32.mrb[0].mxu0
      %531 = vmatprep.mubr.bf16.mxu0 0
      %532 = vmatmul.mubr.bf16.gmra.mrb[0].mxu0 %v378
      %v533 = vpop.f32.mrb[0].mxu0
      %v534 = vadd.f32 0.0, %v533
      %v535 = vpop.f32.mrb[0].mxu0
      %v536 = vpop.f32.mrb[0].mxu0
      %v537 = vadd.f32 0.0, %v536
      %v538 = vpop.f32.mrb[0].mxu0
      %539 = vmatprep.mubr.bf16.mxu0 0
      %540 = vmatmul.mubr.bf16.gmra.mrb[0].mxu0 %v381
      %v541 = vpop.f32.mrb[0].mxu0
      %v542 = vadd.f32 0.0, %v541
      %v543 = vpop.f32.mrb[0].mxu0
      %v544 = vpop.f32.mrb[0].mxu0
      %v545 = vadd.f32 0.0, %v544
      %v546 = vpop.f32.mrb[0].mxu0
      %547 = vdwg.mxu0
      %vm548 = vcmask 64512
      %549 = vst.msk [vmem:[%s179] sm:$0xff] %vm548, %v422
      %550 = vst.msk [vmem:[%s179 + $0x8] sm:$0xff] %vm548, %v425
      %551 = vst.msk [vmem:[%s179 + $0x10] sm:$0xff] %vm548, %v430
      %552 = vst.msk [vmem:[%s179 + $0x18] sm:$0xff] %vm548, %v433
      %553 = vst.msk [vmem:[%s179 + $0x20] sm:$0xff] %vm548, %v438
      %554 = vst.msk [vmem:[%s179 + $0x28] sm:$0xff] %vm548, %v441
      %555 = vst.msk [vmem:[%s179 + $0x30] sm:$0xff] %vm548, %v446
      %556 = vst.msk [vmem:[%s179 + $0x38] sm:$0xff] %vm548, %v449
      %557 = vst.msk [vmem:[%s179 + $0x40] sm:$0xff] %vm548, %v454
      %558 = vst.msk [vmem:[%s179 + $0x48] sm:$0xff] %vm548, %v457
      %559 = vst.msk [vmem:[%s179 + $0x50] sm:$0xff] %vm548, %v462
      %560 = vst.msk [vmem:[%s179 + $0x58] sm:$0xff] %vm548, %v465
      %561 = vst.msk [vmem:[%s179 + $0x60] sm:$0xff] %vm548, %v470
      %562 = vst.msk [vmem:[%s179 + $0x68] sm:$0xff] %vm548, %v473
      %563 = vst.msk [vmem:[%s179 + $0x70] sm:$0xff] %vm548, %v478
      %564 = vst.msk [vmem:[%s179 + $0x78] sm:$0xff] %vm548, %v481
      %565 = vst.msk [vmem:[%s179 + $0x80] sm:$0xff] %vm548, %v486
      %566 = vst.msk [vmem:[%s179 + $0x88] sm:$0xff] %vm548, %v489
      %567 = vst.msk [vmem:[%s179 + $0x90] sm:$0xff] %vm548, %v494
      %568 = vst.msk [vmem:[%s179 + $0x98] sm:$0xff] %vm548, %v497
      %569 = vst.msk [vmem:[%s179 + $0xa0] sm:$0xff] %vm548, %v502
      %570 = vst.msk [vmem:[%s179 + $0xa8] sm:$0xff] %vm548, %v505
      %571 = vst.msk [vmem:[%s179 + $0xb0] sm:$0xff] %vm548, %v510
      %572 = vst.msk [vmem:[%s179 + $0xb8] sm:$0xff] %vm548, %v513
      %573 = vst.msk [vmem:[%s179 + $0xc0] sm:$0xff] %vm548, %v518
      %574 = vst.msk [vmem:[%s179 + $0xc8] sm:$0xff] %vm548, %v521
      %575 = vst.msk [vmem:[%s179 + $0xd0] sm:$0xff] %vm548, %v526
      %576 = vst.msk [vmem:[%s179 + $0xd8] sm:$0xff] %vm548, %v529
      %577 = vst.msk [vmem:[%s179 + $0xe0] sm:$0xff] %vm548, %v534
      %578 = vst.msk [vmem:[%s179 + $0xe8] sm:$0xff] %vm548, %v537
      %579 = vst.msk [vmem:[%s179 + $0xf0] sm:$0xff] %vm548, %v542
      %580 = vst.msk [vmem:[%s179 + $0xf8] sm:$0xff] %vm548, %v545
      %v581 = vsel %vm548, %v422, 0.0
      %v582 = vsel %vm548, %v425, 0.0
      %v583 = vadd.f32 %v581, %v582
      %v584 = vsel %vm548, %v430, 0.0
      %v585 = vadd.f32 %v583, %v584
      %v586 = vsel %vm548, %v433, 0.0
      %v587 = vadd.f32 %v585, %v586
      %v588 = vsel %vm548, %v438, 0.0
      %v589 = vadd.f32 %v587, %v588
      %v590 = vsel %vm548, %v441, 0.0
      %v591 = vadd.f32 %v589, %v590
      %v592 = vsel %vm548, %v446, 0.0
      %v593 = vadd.f32 %v591, %v592
      %v594 = vsel %vm548, %v449, 0.0
      %v595 = vadd.f32 %v593, %v594
      %v596 = vsel %vm548, %v454, 0.0
      %v597 = vadd.f32 %v595, %v596
      %v598 = vsel %vm548, %v457, 0.0
      %v599 = vadd.f32 %v597, %v598
      %v600 = vsel %vm548, %v462, 0.0
      %v601 = vadd.f32 %v599, %v600
      %v602 = vsel %vm548, %v465, 0.0
      %v603 = vadd.f32 %v601, %v602
      %v604 = vsel %vm548, %v470, 0.0
      %v605 = vadd.f32 %v603, %v604
      %v606 = vsel %vm548, %v473, 0.0
      %v607 = vadd.f32 %v605, %v606
      %v608 = vsel %vm548, %v478, 0.0
      %v609 = vadd.f32 %v607, %v608
      %v610 = vsel %vm548, %v481, 0.0
      %v611 = vadd.f32 %v609, %v610
      %v612 = vsel %vm548, %v486, 0.0
      %v613 = vadd.f32 %v611, %v612
      %v614 = vsel %vm548, %v489, 0.0
      %v615 = vadd.f32 %v613, %v614
      %v616 = vsel %vm548, %v494, 0.0
      %v617 = vadd.f32 %v615, %v616
      %v618 = vsel %vm548, %v497, 0.0
      %v619 = vadd.f32 %v617, %v618
      %v620 = vsel %vm548, %v502, 0.0
      %v621 = vadd.f32 %v619, %v620
      %v622 = vsel %vm548, %v505, 0.0
      %v623 = vadd.f32 %v621, %v622
      %v624 = vsel %vm548, %v510, 0.0
      %v625 = vadd.f32 %v623, %v624
      %v626 = vsel %vm548, %v513, 0.0
      %v627 = vadd.f32 %v625, %v626
      %v628 = vsel %vm548, %v518, 0.0
      %v629 = vadd.f32 %v627, %v628
      %v630 = vsel %vm548, %v521, 0.0
      %v631 = vadd.f32 %v629, %v630
      %v632 = vsel %vm548, %v526, 0.0
      %v633 = vadd.f32 %v631, %v632
      %v634 = vsel %vm548, %v529, 0.0
      %v635 = vadd.f32 %v633, %v634
      %v636 = vsel %vm548, %v534, 0.0
      %v637 = vadd.f32 %v635, %v636
      %v638 = vsel %vm548, %v537, 0.0
      %v639 = vadd.f32 %v637, %v638
      %v640 = vsel %vm548, %v542, 0.0
      %v641 = vadd.f32 %v639, %v640
      %v642 = vsel %vm548, %v545, 0.0
      %v643 = vadd.f32 %v641, %v642
      %v644 = vrot.slane %v643, 4
      %v645 = vadd.f32 %v643, %v644
      %v646 = vrot.slane %v645, 2
      %v647 = vadd.f32 %v645, %v646
      %v648 = vrot.slane %v647, 1
      %v649 = vadd.f32 %v647, %v648
      %v650 = vmul.f32 %v422, %v422
      %v651 = vmul.f32 %v425, %v425
      %v652 = vmul.f32 %v430, %v430
      %v653 = vmul.f32 %v433, %v433
      %v654 = vmul.f32 %v438, %v438
      %v655 = vmul.f32 %v441, %v441
      %v656 = vmul.f32 %v446, %v446
      %v657 = vmul.f32 %v449, %v449
      %v658 = vmul.f32 %v454, %v454
      %v659 = vmul.f32 %v457, %v457
      %v660 = vmul.f32 %v462, %v462
      %v661 = vmul.f32 %v465, %v465
      %v662 = vmul.f32 %v470, %v470
      %v663 = vmul.f32 %v473, %v473
      %v664 = vmul.f32 %v478, %v478
      %v665 = vmul.f32 %v481, %v481
      %v666 = vmul.f32 %v486, %v486
      %v667 = vmul.f32 %v489, %v489
      %v668 = vmul.f32 %v494, %v494
      %v669 = vmul.f32 %v497, %v497
      %v670 = vmul.f32 %v502, %v502
      %v671 = vmul.f32 %v505, %v505
      %v672 = vmul.f32 %v510, %v510
      %v673 = vmul.f32 %v513, %v513
      %v674 = vmul.f32 %v518, %v518
      %v675 = vmul.f32 %v521, %v521
      %v676 = vmul.f32 %v526, %v526
      %v677 = vmul.f32 %v529, %v529
      %v678 = vmul.f32 %v534, %v534
      %v679 = vmul.f32 %v537, %v537
      %v680 = vmul.f32 %v542, %v542
      %v681 = vmul.f32 %v545, %v545
      %v682 = vsel %vm548, %v650, 0.0
      %v683 = vsel %vm548, %v651, 0.0
      %v684 = vadd.f32 %v682, %v683
      %v685 = vsel %vm548, %v652, 0.0
      %v686 = vadd.f32 %v684, %v685
      %v687 = vsel %vm548, %v653, 0.0
      %v688 = vadd.f32 %v686, %v687
      %v689 = vsel %vm548, %v654, 0.0
      %v690 = vadd.f32 %v688, %v689
      %v691 = vsel %vm548, %v655, 0.0
      %v692 = vadd.f32 %v690, %v691
      %v693 = vsel %vm548, %v656, 0.0
      %v694 = vadd.f32 %v692, %v693
      %v695 = vsel %vm548, %v657, 0.0
      %v696 = vadd.f32 %v694, %v695
      %v697 = vsel %vm548, %v658, 0.0
      %v698 = vadd.f32 %v696, %v697
      %v699 = vsel %vm548, %v659, 0.0
      %v700 = vadd.f32 %v698, %v699
      %v701 = vsel %vm548, %v660, 0.0
      %v702 = vadd.f32 %v700, %v701
      %v703 = vsel %vm548, %v661, 0.0
      %v704 = vadd.f32 %v702, %v703
      %v705 = vsel %vm548, %v662, 0.0
      %v706 = vadd.f32 %v704, %v705
      %v707 = vsel %vm548, %v663, 0.0
      %v708 = vadd.f32 %v706, %v707
      %v709 = vsel %vm548, %v664, 0.0
      %v710 = vadd.f32 %v708, %v709
      %v711 = vsel %vm548, %v665, 0.0
      %v712 = vadd.f32 %v710, %v711
      %v713 = vsel %vm548, %v666, 0.0
      %v714 = vadd.f32 %v712, %v713
      %v715 = vsel %vm548, %v667, 0.0
      %v716 = vadd.f32 %v714, %v715
      %v717 = vsel %vm548, %v668, 0.0
      %v718 = vadd.f32 %v716, %v717
      %v719 = vsel %vm548, %v669, 0.0
      %v720 = vadd.f32 %v718, %v719
      %v721 = vsel %vm548, %v670, 0.0
      %v722 = vadd.f32 %v720, %v721
      %v723 = vsel %vm548, %v671, 0.0
      %v724 = vadd.f32 %v722, %v723
      %v725 = vsel %vm548, %v672, 0.0
      %v726 = vadd.f32 %v724, %v725
      %v727 = vsel %vm548, %v673, 0.0
      %v728 = vadd.f32 %v726, %v727
      %v729 = vsel %vm548, %v674, 0.0
      %v730 = vadd.f32 %v728, %v729
      %v731 = vsel %vm548, %v675, 0.0
      %v732 = vadd.f32 %v730, %v731
      %v733 = vsel %vm548, %v676, 0.0
      %v734 = vadd.f32 %v732, %v733
      %v735 = vsel %vm548, %v677, 0.0
      %v736 = vadd.f32 %v734, %v735
      %v737 = vsel %vm548, %v678, 0.0
      %v738 = vadd.f32 %v736, %v737
      %v739 = vsel %vm548, %v679, 0.0
      %v740 = vadd.f32 %v738, %v739
      %v741 = vsel %vm548, %v680, 0.0
      %v742 = vadd.f32 %v740, %v741
      %v743 = vsel %vm548, %v681, 0.0
      %v744 = vadd.f32 %v742, %v743
      %v745 = vrot.slane %v744, 4
      %v746 = vadd.f32 %v744, %v745
      %v747 = vrot.slane %v746, 2
      %v748 = vadd.f32 %v746, %v747
      %v749 = vrot.slane %v748, 1
      %v750 = vadd.f32 %v748, %v749
      %vm751 = vcmask 1040384
      %v752 = vsel %vm751, %v649, %v750
      %vm753 = vcmask 58368
      %754 = vst.msk [vmem:[%s184] sm:$0x3] %vm753, %v752
      %s755 = smul.u32 32, %s15
      %p756 = scmp.lt.s32.totalorder %s755, 63
      %s757 = scalar_select %p756, %s755, 63
      %s758 = smul.addr %s757, 8
      %s759 = scalar_lea.vmem %s2, %s758
      %p760 = scmp.lt.s32.totalorder %s15, 1
      %s761 = scalar_select %p760, %s15, 1
      %s762 = smul.addr %s761, 2
      %s763 = scalar_lea.vmem %s3, %s762
      // Predicated region
      $region29: #{double_conv.6} parent=27 // pred_check
        %p764 = pneg %p80
      $region30: #{double_conv.6} parent=27 // pred_check_branch
        %766 = sbr.rel (%p764) target = $region32
      $region31: #{double_conv.6} parent=27 // pred_region
        %s767 = smul.u32 32, %s15
      $region32: #{double_conv.6} parent=27 // pred_fallthru
        _
      // Predicated region
      $region33: #{double_conv.6} parent=27 // pred_check
        %p768 = pneg %p106
      $region34: #{double_conv.6} parent=27 // pred_check_branch
        %770 = sbr.rel (%p768) target = $region36
      $region35: #{double_conv.6} parent=27 // pred_region
        _
      $region36: #{double_conv.6} parent=27 // pred_fallthru
        _
    $region28: #{double_conv.6} parent=5 // pred_fallthru
      _
    %p771 = scmp.le.s32.totalorder 2, %s10
    // Predicated region
    $region37: #{double_conv.6} parent=5 // pred_check
      %p772 = pneg %p771
    $region38: #{double_conv.6} parent=5 // pred_check_branch
      %774 = sbr.rel (%p772) target = $region40
    $region39: #{double_conv.6} parent=5 // pred_region
      %s775 = ssub.s32 %s10, 2
      // Predicated region
      $region41: #{double_conv.6} parent=39 // pred_check
        %p776 = pneg %p86
      $region42: #{double_conv.6} parent=39 // pred_check_branch
        %778 = sbr.rel (%p776) target = $region44
      $region43: #{double_conv.6} parent=39 // pred_region
        %s779 = smul.u32 32, %s16
        %p780 = scmp.lt.s32.totalorder %s779, 63
        %s781 = scalar_select %p780, %s779, 63
        %s782 = smul.addr %s781, 8
        %s783 = scalar_lea.vmem %s2, %s782
      $region44: #{double_conv.6} parent=39 // pred_fallthru
        _
      // Predicated region
      $region45: #{double_conv.6} parent=39 // pred_check
        %p784 = pneg %p112
      $region46: #{double_conv.6} parent=39 // pred_check_branch
        %786 = sbr.rel (%p784) target = $region48
      $region47: #{double_conv.6} parent=39 // pred_region
        %p787 = scmp.lt.s32.totalorder %s16, 1
        %s788 = scalar_select %p787, %s16, 1
        %s789 = smul.addr %s788, 2
        %s790 = scalar_lea.vmem %s3, %s789
      $region48: #{double_conv.6} parent=39 // pred_fallthru
        _
    $region40: #{double_conv.6} parent=5 // pred_fallthru
      _
  $region6: #{double_conv.6} parent=0 // loop_footer
    %s14 = sadd.s32 1, %s10
  $region7: #{double_conv.6} parent=0 // loop_footer_branch
    %9 = sbr.rel target = $region3
  $region8: #{double_conv.6} parent=0 // loop_exit
    _

</llo_original>
